<compile_context>
chip_gen: v7x
topology: tpu7x:2x2x1
jax: 0.10.0
libtpu: 0.0.40
codegen_flags: <defaults>
</compile_context>

<pallas_src>
import functools

import jax
import jax.numpy as jnp
from jax import lax
from jax.experimental import pallas as pl
from jax.experimental.pallas import tpu as pltpu

LEAKY_SLOPE = 0.2
GN_EPS = 1e-5


def _leaky(x):
    return jnp.where(x > 0, x, LEAKY_SLOPE * x)


def resnet_block_kernel(x_ref, mask_ref, w0_ref, b0_ref, g0w_ref, g0b_ref, gm0_ref,
                        w1_ref, g1w_ref, g1b_ref, gm1_ref, ws_ref, out_ref,
                        *, W, M, Bt):
    """One grid step processes Bt packed samples laid out as (C, Bt*M).

    Channels live on sublanes, flattened spatial (and packed samples) on lanes,
    so every load/store is lane-dense, 3x3 taps are lane rotations (XLU) and
    each conv is one fused bf16 im2col matmul on the MXU.
    """
    x = x_ref[0]                       # (Cin, Bt*M) f32
    masks = mask_ref[...]              # (9, Bt*M) bf16 {0,1} SAME-padding validity

    def conv3x3(a, w_ref):
        # a: (C, Bt*M) f32 (already activated).  Rolls wrap within the packed
        # Bt*M axis; every position that could receive wrapped or cross-sample
        # data is zeroed by its validity mask, so packing is safe.
        # Rolls stay in f32 (32-bit lane rotate is the guaranteed-supported
        # path); each tap is cast to bf16 immediately, so the concatenated
        # patches, the masking multiplies and the MXU operands are all bf16.
        n_lane = a.shape[1]
        taps = []
        k = 0
        for dh in (-1, 0, 1):
            for dw in (-1, 0, 1):
                s = dh * W + dw                      # tap[p] = a[p + s] when valid
                if s == 0:
                    t = a.astype(jnp.bfloat16)       # center tap needs no mask
                else:
                    # pltpu.roll == jnp.roll semantics: roll(a, k)[i] = a[i - k]
                    t = pltpu.roll(a, shift=(-s) % n_lane, axis=1).astype(jnp.bfloat16)
                    t = t * masks[k:k + 1, :]
                taps.append(t)
                k += 1
        patches = jnp.concatenate(taps, axis=0)                 # (9*C, Bt*M) bf16
        return jnp.dot(w_ref[...], patches,
                       preferred_element_type=jnp.float32)      # (Cout, Bt*M) f32

    def group_norm(y, gamma_ref, beta_ref, gmat_ref):
        # y: (C, Bt*M) f32.  Per-sample, two-pass statistics (mean, then
        # centered sum of squares) kept entirely in f32.  gmat (C, C) is the
        # hoisted same-group indicator pre-scaled by 1/(M * channels_per_group),
        # so group folding is one tiny matmul.
        gamma = gamma_ref[...]          # (C, 1)
        beta = beta_ref[...]            # (C, 1)
        gmat = gmat_ref[...]            # (C, C) f32
        outs = []
        for b in range(Bt):             # Bt is small; unrolled at trace time
            yb = y[:, b * M:(b + 1) * M]                        # aligned lane slice
            s1 = jnp.sum(yb, axis=1, keepdims=True)             # (C, 1)
            mean = jnp.dot(gmat, s1, preferred_element_type=jnp.float32)
            cen = yb - mean
            var = jnp.dot(gmat, jnp.sum(cen * cen, axis=1, keepdims=True),
                          preferred_element_type=jnp.float32)
            rstd = lax.rsqrt(var + GN_EPS)
            outs.append(cen * (rstd * gamma) + beta)
        return outs[0] if Bt == 1 else jnp.concatenate(outs, axis=1)

    # conv_0: LeakyReLU -> 3x3 conv (+bias) -> GroupNorm
    y0 = conv3x3(_leaky(x), w0_ref) + b0_ref[...]
    y0 = group_norm(y0, g0w_ref, g0b_ref, gm0_ref)

    # conv_1: LeakyReLU -> 3x3 conv (no bias) -> GroupNorm
    y1 = conv3x3(_leaky(y0), w1_ref)
    y1 = group_norm(y1, g1w_ref, g1b_ref, gm1_ref)

    # learned 1x1 shortcut (no bias) + residual; lane-dense unmasked store.
    xs = jnp.dot(ws_ref[...], x.astype(jnp.bfloat16),
                 preferred_element_type=jnp.float32)            # (Cout, Bt*M)
    out_ref[0] = xs + 0.1 * y1


def _pick_block_batch(B, M, lane_budget=2048):
    """Samples packed per grid step.

    Pack samples to amortize the ~0.35us per-grid-step overhead and keep blocks
    small, but keep >= 2 grid steps when the batch allows it so the batch axis
    can still be sharded across TensorCores (v7x megacore) and the pipeline has
    something to overlap."""
    divisors = [d for d in range(1, B + 1) if B % d == 0 and d * M <= lane_budget]
    if not divisors:
        return 1
    multi_step = [d for d in divisors if B // d >= 2]
    return max(multi_step) if multi_step else max(divisors)


def resnet_block_pallas(x_nchw, params, groups):
    B, Cin, H, W = x_nchw.shape
    M = H * W                       # ideally a multiple of 128 -> lane-dense blocks
    Ch = params["w0_mat"].shape[0]
    Cout = params["w1_mat"].shape[0]
    assert Ch % groups == 0 and Cout % groups == 0, "channels must divide groups"

    Bt = _pick_block_batch(B, M)
    nb = B // Bt
    BtM = Bt * M

    # NCHW -> (nb, Cin, Bt*M): channels on sublanes, packed spatial on lanes.
    # (Layout plumbing only; done once outside the kernel.)
    x_pack = jnp.transpose(x_nchw.reshape(nb, Bt, Cin, M),
                           (0, 2, 1, 3)).reshape(nb, Cin, BtM)

    # SAME-padding validity masks for the 9 taps (hoisted out of the kernel).
    p = jnp.arange(BtM, dtype=jnp.int32) % M
    hh, jj = p // W, p % W
    rows = []
    for dh in (-1, 0, 1):
        hv = (hh + dh >= 0) & (hh + dh < H)
        for dw in (-1, 0, 1):
            wv = (jj + dw >= 0) & (jj + dw < W)
            rows.append(hv & wv)
    mask9 = jnp.stack(rows, axis=0).astype(jnp.bfloat16)        # (9, Bt*M)

    # Same-group indicator matrices, pre-scaled by 1/(M * channels_per_group)
    # (constant across grid steps; hoisted out of the kernel).
    def group_mat(C):
        cg = C // groups
        idx = jnp.arange(C, dtype=jnp.int32)
        same = (idx[:, None] // cg) == (idx[None, :] // cg)
        return same.astype(jnp.float32) * (1.0 / float(M * cg))

    gmat0 = group_mat(Ch)
    gmat1 = group_mat(Cout)

    kernel = functools.partial(resnet_block_kernel, W=W, M=M, Bt=Bt)

    flops = 2 * B * M * (9 * Cin * Ch + 9 * Ch * Cout + Cin * Cout)
    bytes_accessed = (4 * B * M * (Cin + Cout) + 2 * 9 * B * M
                      + 2 * (9 * Cin * Ch + 9 * Ch * Cout + Cin * Cout))

    out_pack = pl.pallas_call(
        kernel,
        out_shape=jax.ShapeDtypeStruct((nb, Cout, BtM), jnp.float32),
        grid=(nb,),
        in_specs=[
            pl.BlockSpec((1, Cin, BtM), lambda b: (b, 0, 0)),
            pl.BlockSpec(mask9.shape, lambda b: (0, 0)),
            pl.BlockSpec(params["w0_mat"].shape, lambda b: (0, 0)),
            pl.BlockSpec(params["b0"].shape, lambda b: (0, 0)),
            pl.BlockSpec(params["g0w"].shape, lambda b: (0, 0)),
            pl.BlockSpec(params["g0b"].shape, lambda b: (0, 0)),
            pl.BlockSpec(gmat0.shape, lambda b: (0, 0)),
            pl.BlockSpec(params["w1_mat"].shape, lambda b: (0, 0)),
            pl.BlockSpec(params["g1w"].shape, lambda b: (0, 0)),
            pl.BlockSpec(params["g1b"].shape, lambda b: (0, 0)),
            pl.BlockSpec(gmat1.shape, lambda b: (0, 0)),
            pl.BlockSpec(params["ws_mat"].shape, lambda b: (0, 0)),
        ],
        out_specs=pl.BlockSpec((1, Cout, BtM), lambda b: (b, 0, 0)),
        compiler_params=pltpu.CompilerParams(
            dimension_semantics=("parallel",),       # batch axis -> megacore on v7x
            # Tiny working set at these shapes; raise (v5e/v6e up to ~100 MiB,
            # v7x ~56 MiB) when spatial tiles grow per the TODO above.
            vmem_limit_bytes=32 * 1024 * 1024),
        cost_estimate=pl.CostEstimate(flops=flops,
                                      transcendentals=B * (Ch + Cout),
                                      bytes_accessed=bytes_accessed),
    )(x_pack, mask9, params["w0_mat"], params["b0"], params["g0w"], params["g0b"],
      gmat0, params["w1_mat"], params["g1w"], params["g1b"], gmat1, params["ws_mat"])

    out = jnp.transpose(out_pack.reshape(nb, Cout, Bt, M), (0, 2, 1, 3))
    return out.reshape(B, Cout, H, W)


# ----------------------- pure-JAX f32 reference -----------------------
def ref_forward(x_nchw, params, groups):
    x = jnp.transpose(x_nchw, (0, 2, 3, 1))

    def gn(y, gamma, beta):
        B, H, W, C = y.shape
        yg = y.reshape(B, H, W, groups, C // groups)
        m = jnp.mean(yg, axis=(1, 2, 4), keepdims=True)
        v = jnp.mean((yg - m) ** 2, axis=(1, 2, 4), keepdims=True)
        yn = ((yg - m) / jnp.sqrt(v + GN_EPS)).reshape(B, H, W, C)
        return yn * gamma.reshape(1, 1, 1, C) + beta.reshape(1, 1, 1, C)

    def conv(v, w):
        return lax.conv_general_dilated(
            v, w, (1, 1), [(1, 1), (1, 1)],
            dimension_numbers=("NHWC", "HWIO", "NHWC"))

    y0 = conv(_leaky(x), params["w0_hwio"]) + params["b0"].reshape(1, 1, 1, -1)
    y0 = gn(y0, params["g0w"], params["g0b"])
    y1 = conv(_leaky(y0), params["w1_hwio"])
    y1 = gn(y1, params["g1w"], params["g1b"])
    xs = jnp.einsum("bhwc,cd->bhwd", x, params["ws_io"])
    return jnp.transpose(xs + 0.1 * y1, (0, 3, 1, 2))


def make_params(key, fin, fout, fhidden):
    ks = jax.random.split(key, 8)
    # PyTorch-style OIHW weights.
    w0_oihw = 0.1 * jax.random.normal(ks[0], (fhidden, fin, 3, 3), jnp.float32)
    w1_oihw = 0.1 * jax.random.normal(ks[1], (fout, fhidden, 3, 3), jnp.float32)
    ws_oihw = 0.1 * jax.random.normal(ks[2], (fout, fin, 1, 1), jnp.float32)
    b0 = 0.1 * jax.random.normal(ks[3], (fhidden,), jnp.float32)
    g0w = 1.0 + 0.1 * jax.random.normal(ks[4], (fhidden,), jnp.float32)
    g0b = 0.1 * jax.random.normal(ks[5], (fhidden,), jnp.float32)
    g1w = 1.0 + 0.1 * jax.random.normal(ks[6], (fout,), jnp.float32)
    g1b = 0.1 * jax.random.normal(ks[7], (fout,), jnp.float32)

    w0_hwio = jnp.transpose(w0_oihw, (2, 3, 1, 0))           # (3,3,fin,fhidden)
    w1_hwio = jnp.transpose(w1_oihw, (2, 3, 1, 0))           # (3,3,fhidden,fout)
    ws_io = jnp.transpose(ws_oihw[:, :, 0, 0], (1, 0))       # (fin,fout)

    return {
        # kernel-format weights for the (C, M) layout, pre-cast to bf16:
        #   w_mat[o, (kh*3+kw)*Cin + i] = w_oihw[o, i, kh, kw]
        "w0_mat": jnp.transpose(w0_oihw, (0, 2, 3, 1))
                     .reshape(fhidden, 9 * fin).astype(jnp.bfloat16),
        "w1_mat": jnp.transpose(w1_oihw, (0, 2, 3, 1))
                     .reshape(fout, 9 * fhidden).astype(jnp.bfloat16),
        "ws_mat": ws_oihw[:, :, 0, 0].astype(jnp.bfloat16),   # (fout, fin)
        "b0": b0.reshape(fhidden, 1),
        "g0w": g0w.reshape(fhidden, 1), "g0b": g0b.reshape(fhidden, 1),
        "g1w": g1w.reshape(fout, 1), "g1b": g1b.reshape(fout, 1),
        # f32 reference-format weights
        "w0_hwio": w0_hwio, "w1_hwio": w1_hwio, "ws_io": ws_io,
    }


if __name__ == "__main__":
    B, FIN, FOUT, H, W = 2, 4, 8, 16, 16
    FHIDDEN = min(FIN, FOUT)   # module default: fhidden = min(fin, fout)
    GROUPS = 4                 # norm_ch default

    key = jax.random.PRNGKey(0)
    kx, kp = jax.random.split(key)
    x_nchw = jax.random.normal(kx, (B, FIN, H, W), jnp.float32)
    params = make_params(kp, FIN, FOUT, FHIDDEN)

    out = jax.block_until_ready(resnet_block_pallas(x_nchw, params, GROUPS))
    ref = jax.block_until_ready(ref_forward(x_nchw, params, GROUPS))

    assert out.shape == (B, FOUT, H, W)
    # bf16 MXU inputs with f32 accumulation -> slightly looser tolerance than pure f32.
    assert jnp.allclose(out, ref, atol=2e-2, rtol=2e-2), \
        f"mismatch vs reference, max abs diff = {float(jnp.max(jnp.abs(out - ref)))}"

    print("KERNEL_OK")
</pallas_src>

<mosaic_0001>
module attributes {stable_mosaic.version = 11 : i64} {
  func.func @resnet_block_kernel(%arg0: i32, %arg1: memref<1x4x256xf32, #tpu.memory_space<vmem>>, %arg2: memref<9x256xbf16, #tpu.memory_space<vmem>>, %arg3: memref<4x36xbf16, #tpu.memory_space<vmem>>, %arg4: memref<4x1xf32, #tpu.memory_space<vmem>>, %arg5: memref<4x1xf32, #tpu.memory_space<vmem>>, %arg6: memref<4x1xf32, #tpu.memory_space<vmem>>, %arg7: memref<4x4xf32, #tpu.memory_space<vmem>>, %arg8: memref<8x36xbf16, #tpu.memory_space<vmem>>, %arg9: memref<8x1xf32, #tpu.memory_space<vmem>>, %arg10: memref<8x1xf32, #tpu.memory_space<vmem>>, %arg11: memref<8x8xf32, #tpu.memory_space<vmem>>, %arg12: memref<8x4xbf16, #tpu.memory_space<vmem>>, %arg13: memref<1x8x256xf32, #tpu.memory_space<vmem>>) attributes {dimension_semantics = [#tpu.dimension_semantics<parallel>], iteration_bounds = array<i64: 2>, scalar_prefetch = 0 : i64, scratch_operands = 0 : i64, tpu.core_type = #tpu.core_type<tc>, window_params = [{transform_indices = @transform_0, window_bounds = array<i64: 1, 4, 256>}, {pipeline_mode = #tpu.pipeline_mode<synchronous>, transform_indices = @transform_1, window_bounds = array<i64: 9, 256>}, {pipeline_mode = #tpu.pipeline_mode<synchronous>, transform_indices = @transform_2, window_bounds = array<i64: 4, 36>}, {pipeline_mode = #tpu.pipeline_mode<synchronous>, transform_indices = @transform_3, window_bounds = array<i64: 4, 1>}, {pipeline_mode = #tpu.pipeline_mode<synchronous>, transform_indices = @transform_4, window_bounds = array<i64: 4, 1>}, {pipeline_mode = #tpu.pipeline_mode<synchronous>, transform_indices = @transform_5, window_bounds = array<i64: 4, 1>}, {pipeline_mode = #tpu.pipeline_mode<synchronous>, transform_indices = @transform_6, window_bounds = array<i64: 4, 4>}, {pipeline_mode = #tpu.pipeline_mode<synchronous>, transform_indices = @transform_7, window_bounds = array<i64: 8, 36>}, {pipeline_mode = #tpu.pipeline_mode<synchronous>, transform_indices = @transform_8, window_bounds = array<i64: 8, 1>}, {pipeline_mode = #tpu.pipeline_mode<synchronous>, transform_indices = @transform_9, window_bounds = array<i64: 8, 1>}, {pipeline_mode = #tpu.pipeline_mode<synchronous>, transform_indices = @transform_10, window_bounds = array<i64: 8, 8>}, {pipeline_mode = #tpu.pipeline_mode<synchronous>, transform_indices = @transform_11, window_bounds = array<i64: 8, 4>}, {transform_indices = @transform_12, window_bounds = array<i64: 1, 8, 256>}]} {
    %c0 = arith.constant 0 : index
    %c0_0 = arith.constant 0 : index
    %c0_1 = arith.constant 0 : index
    %0 = vector.load %arg1[%c0, %c0_0, %c0_1] : memref<1x4x256xf32, #tpu.memory_space<vmem>>, vector<1x4x256xf32>
    %1 = vector.shape_cast %0 : vector<1x4x256xf32> to vector<4x256xf32>
    %c0_2 = arith.constant 0 : index
    %c0_3 = arith.constant 0 : index
    %2 = vector.load %arg2[%c0_2, %c0_3] : memref<9x256xbf16, #tpu.memory_space<vmem>>, vector<9x256xbf16>
    %cst = arith.constant 0.000000e+00 : f32
    %3 = vector.broadcast %cst : f32 to vector<4x256xf32>
    %4 = arith.cmpf ogt, %1, %3 : vector<4x256xf32>
    %cst_4 = arith.constant 2.000000e-01 : f32
    %5 = vector.broadcast %cst_4 : f32 to vector<4x256xf32>
    %6 = arith.mulf %5, %1 : vector<4x256xf32>
    %7 = arith.select %4, %1, %6 : vector<4x256xi1>, vector<4x256xf32>
    %c17_i32 = arith.constant 17 : i32
    %8 = tpu.dynamic_rotate %7 by %c17_i32 dim 1 : vector<4x256xf32>, i32 -> vector<4x256xf32>
    %9 = arith.truncf %8 : vector<4x256xf32> to vector<4x256xbf16>
    %10 = vector.extract_strided_slice %2 {offsets = [0, 0], sizes = [1, 256], strides = [1, 1]} : vector<9x256xbf16> to vector<1x256xbf16>
    %11 = vector.broadcast %10 : vector<1x256xbf16> to vector<4x256xbf16>
    %12 = arith.mulf %9, %11 : vector<4x256xbf16>
    %c16_i32 = arith.constant 16 : i32
    %13 = tpu.dynamic_rotate %7 by %c16_i32 dim 1 : vector<4x256xf32>, i32 -> vector<4x256xf32>
    %14 = arith.truncf %13 : vector<4x256xf32> to vector<4x256xbf16>
    %15 = vector.extract_strided_slice %2 {offsets = [1, 0], sizes = [1, 256], strides = [1, 1]} : vector<9x256xbf16> to vector<1x256xbf16>
    %16 = vector.broadcast %15 : vector<1x256xbf16> to vector<4x256xbf16>
    %17 = arith.mulf %14, %16 : vector<4x256xbf16>
    %c15_i32 = arith.constant 15 : i32
    %18 = tpu.dynamic_rotate %7 by %c15_i32 dim 1 : vector<4x256xf32>, i32 -> vector<4x256xf32>
    %19 = arith.truncf %18 : vector<4x256xf32> to vector<4x256xbf16>
    %20 = vector.extract_strided_slice %2 {offsets = [2, 0], sizes = [1, 256], strides = [1, 1]} : vector<9x256xbf16> to vector<1x256xbf16>
    %21 = vector.broadcast %20 : vector<1x256xbf16> to vector<4x256xbf16>
    %22 = arith.mulf %19, %21 : vector<4x256xbf16>
    %c1_i32 = arith.constant 1 : i32
    %23 = tpu.dynamic_rotate %7 by %c1_i32 dim 1 : vector<4x256xf32>, i32 -> vector<4x256xf32>
    %24 = arith.truncf %23 : vector<4x256xf32> to vector<4x256xbf16>
    %25 = vector.extract_strided_slice %2 {offsets = [3, 0], sizes = [1, 256], strides = [1, 1]} : vector<9x256xbf16> to vector<1x256xbf16>
    %26 = vector.broadcast %25 : vector<1x256xbf16> to vector<4x256xbf16>
    %27 = arith.mulf %24, %26 : vector<4x256xbf16>
    %28 = arith.truncf %7 : vector<4x256xf32> to vector<4x256xbf16>
    %c255_i32 = arith.constant 255 : i32
    %29 = tpu.dynamic_rotate %7 by %c255_i32 dim 1 : vector<4x256xf32>, i32 -> vector<4x256xf32>
    %30 = arith.truncf %29 : vector<4x256xf32> to vector<4x256xbf16>
    %31 = vector.extract_strided_slice %2 {offsets = [5, 0], sizes = [1, 256], strides = [1, 1]} : vector<9x256xbf16> to vector<1x256xbf16>
    %32 = vector.broadcast %31 : vector<1x256xbf16> to vector<4x256xbf16>
    %33 = arith.mulf %30, %32 : vector<4x256xbf16>
    %c241_i32 = arith.constant 241 : i32
    %34 = tpu.dynamic_rotate %7 by %c241_i32 dim 1 : vector<4x256xf32>, i32 -> vector<4x256xf32>
    %35 = arith.truncf %34 : vector<4x256xf32> to vector<4x256xbf16>
    %36 = vector.extract_strided_slice %2 {offsets = [6, 0], sizes = [1, 256], strides = [1, 1]} : vector<9x256xbf16> to vector<1x256xbf16>
    %37 = vector.broadcast %36 : vector<1x256xbf16> to vector<4x256xbf16>
    %38 = arith.mulf %35, %37 : vector<4x256xbf16>
    %c240_i32 = arith.constant 240 : i32
    %39 = tpu.dynamic_rotate %7 by %c240_i32 dim 1 : vector<4x256xf32>, i32 -> vector<4x256xf32>
    %40 = arith.truncf %39 : vector<4x256xf32> to vector<4x256xbf16>
    %41 = vector.extract_strided_slice %2 {offsets = [7, 0], sizes = [1, 256], strides = [1, 1]} : vector<9x256xbf16> to vector<1x256xbf16>
    %42 = vector.broadcast %41 : vector<1x256xbf16> to vector<4x256xbf16>
    %43 = arith.mulf %40, %42 : vector<4x256xbf16>
    %c239_i32 = arith.constant 239 : i32
    %44 = tpu.dynamic_rotate %7 by %c239_i32 dim 1 : vector<4x256xf32>, i32 -> vector<4x256xf32>
    %45 = arith.truncf %44 : vector<4x256xf32> to vector<4x256xbf16>
    %46 = vector.extract_strided_slice %2 {offsets = [8, 0], sizes = [1, 256], strides = [1, 1]} : vector<9x256xbf16> to vector<1x256xbf16>
    %47 = vector.broadcast %46 : vector<1x256xbf16> to vector<4x256xbf16>
    %48 = arith.mulf %45, %47 : vector<4x256xbf16>
    %49 = tpu.concatenate %12, %17, %22, %27, %28, %33, %38, %43, %48 in 0 : vector<4x256xbf16>, vector<4x256xbf16>, vector<4x256xbf16>, vector<4x256xbf16>, vector<4x256xbf16>, vector<4x256xbf16>, vector<4x256xbf16>, vector<4x256xbf16>, vector<4x256xbf16> -> vector<36x256xbf16>
    %c0_5 = arith.constant 0 : index
    %c0_6 = arith.constant 0 : index
    %50 = vector.load %arg3[%c0_5, %c0_6] : memref<4x36xbf16, #tpu.memory_space<vmem>>, vector<4x36xbf16>
    %cst_7 = arith.constant dense<0.000000e+00> : vector<4x256xf32>
    %51 = tpu.matmul %50, %49, %cst_7 {dimension_numbers = #tpu.dot_dimension_numbers<[1], [0], [0], [1], [0, 0, 1, 1], [], []>} : vector<4x36xbf16>, vector<36x256xbf16>, vector<4x256xf32> -> vector<4x256xf32>
    %c0_8 = arith.constant 0 : index
    %c0_9 = arith.constant 0 : index
    %52 = vector.load %arg4[%c0_8, %c0_9] : memref<4x1xf32, #tpu.memory_space<vmem>>, vector<4x1xf32>
    %53 = vector.broadcast %52 : vector<4x1xf32> to vector<4x256xf32>
    %54 = arith.addf %51, %53 : vector<4x256xf32>
    %c0_10 = arith.constant 0 : index
    %c0_11 = arith.constant 0 : index
    %55 = vector.load %arg5[%c0_10, %c0_11] : memref<4x1xf32, #tpu.memory_space<vmem>>, vector<4x1xf32>
    %c0_12 = arith.constant 0 : index
    %c0_13 = arith.constant 0 : index
    %56 = vector.load %arg6[%c0_12, %c0_13] : memref<4x1xf32, #tpu.memory_space<vmem>>, vector<4x1xf32>
    %c0_14 = arith.constant 0 : index
    %c0_15 = arith.constant 0 : index
    %57 = vector.load %arg7[%c0_14, %c0_15] : memref<4x4xf32, #tpu.memory_space<vmem>>, vector<4x4xf32>
    %cst_16 = arith.constant dense<0.000000e+00> : vector<4xf32>
    %58 = vector.multi_reduction <add>, %54, %cst_16 [1] : vector<4x256xf32> to vector<4xf32>
    %59 = vector.shape_cast %58 : vector<4xf32> to vector<4x1xf32>
    %cst_17 = arith.constant dense<0.000000e+00> : vector<4x1xf32>
    %60 = tpu.matmul %57, %59, %cst_17 {dimension_numbers = #tpu.dot_dimension_numbers<[1], [0], [0], [1], [0, 0, 1, 1], [], []>} : vector<4x4xf32>, vector<4x1xf32>, vector<4x1xf32> -> vector<4x1xf32>
    %61 = vector.broadcast %60 : vector<4x1xf32> to vector<4x256xf32>
    %62 = arith.subf %54, %61 : vector<4x256xf32>
    %63 = arith.mulf %62, %62 : vector<4x256xf32>
    %cst_18 = arith.constant dense<0.000000e+00> : vector<4xf32>
    %64 = vector.multi_reduction <add>, %63, %cst_18 [1] : vector<4x256xf32> to vector<4xf32>
    %65 = vector.shape_cast %64 : vector<4xf32> to vector<4x1xf32>
    %cst_19 = arith.constant dense<0.000000e+00> : vector<4x1xf32>
    %66 = tpu.matmul %57, %65, %cst_19 {dimension_numbers = #tpu.dot_dimension_numbers<[1], [0], [0], [1], [0, 0, 1, 1], [], []>} : vector<4x4xf32>, vector<4x1xf32>, vector<4x1xf32> -> vector<4x1xf32>
    %cst_20 = arith.constant 9.99999974E-6 : f32
    %67 = vector.broadcast %cst_20 : f32 to vector<4x1xf32>
    %68 = arith.addf %66, %67 : vector<4x1xf32>
    %69 = math.rsqrt %68 : vector<4x1xf32>
    %70 = arith.mulf %69, %55 : vector<4x1xf32>
    %71 = vector.broadcast %70 : vector<4x1xf32> to vector<4x256xf32>
    %72 = arith.mulf %62, %71 : vector<4x256xf32>
    %73 = vector.broadcast %56 : vector<4x1xf32> to vector<4x256xf32>
    %74 = arith.addf %72, %73 : vector<4x256xf32>
    %cst_21 = arith.constant 0.000000e+00 : f32
    %75 = vector.broadcast %cst_21 : f32 to vector<4x256xf32>
    %76 = arith.cmpf ogt, %74, %75 : vector<4x256xf32>
    %cst_22 = arith.constant 2.000000e-01 : f32
    %77 = vector.broadcast %cst_22 : f32 to vector<4x256xf32>
    %78 = arith.mulf %77, %74 : vector<4x256xf32>
    %79 = arith.select %76, %74, %78 : vector<4x256xi1>, vector<4x256xf32>
    %c17_i32_23 = arith.constant 17 : i32
    %80 = tpu.dynamic_rotate %79 by %c17_i32_23 dim 1 : vector<4x256xf32>, i32 -> vector<4x256xf32>
    %81 = arith.truncf %80 : vector<4x256xf32> to vector<4x256xbf16>
    %82 = vector.extract_strided_slice %2 {offsets = [0, 0], sizes = [1, 256], strides = [1, 1]} : vector<9x256xbf16> to vector<1x256xbf16>
    %83 = vector.broadcast %82 : vector<1x256xbf16> to vector<4x256xbf16>
    %84 = arith.mulf %81, %83 : vector<4x256xbf16>
    %c16_i32_24 = arith.constant 16 : i32
    %85 = tpu.dynamic_rotate %79 by %c16_i32_24 dim 1 : vector<4x256xf32>, i32 -> vector<4x256xf32>
    %86 = arith.truncf %85 : vector<4x256xf32> to vector<4x256xbf16>
    %87 = vector.extract_strided_slice %2 {offsets = [1, 0], sizes = [1, 256], strides = [1, 1]} : vector<9x256xbf16> to vector<1x256xbf16>
    %88 = vector.broadcast %87 : vector<1x256xbf16> to vector<4x256xbf16>
    %89 = arith.mulf %86, %88 : vector<4x256xbf16>
    %c15_i32_25 = arith.constant 15 : i32
    %90 = tpu.dynamic_rotate %79 by %c15_i32_25 dim 1 : vector<4x256xf32>, i32 -> vector<4x256xf32>
    %91 = arith.truncf %90 : vector<4x256xf32> to vector<4x256xbf16>
    %92 = vector.extract_strided_slice %2 {offsets = [2, 0], sizes = [1, 256], strides = [1, 1]} : vector<9x256xbf16> to vector<1x256xbf16>
    %93 = vector.broadcast %92 : vector<1x256xbf16> to vector<4x256xbf16>
    %94 = arith.mulf %91, %93 : vector<4x256xbf16>
    %c1_i32_26 = arith.constant 1 : i32
    %95 = tpu.dynamic_rotate %79 by %c1_i32_26 dim 1 : vector<4x256xf32>, i32 -> vector<4x256xf32>
    %96 = arith.truncf %95 : vector<4x256xf32> to vector<4x256xbf16>
    %97 = vector.extract_strided_slice %2 {offsets = [3, 0], sizes = [1, 256], strides = [1, 1]} : vector<9x256xbf16> to vector<1x256xbf16>
    %98 = vector.broadcast %97 : vector<1x256xbf16> to vector<4x256xbf16>
    %99 = arith.mulf %96, %98 : vector<4x256xbf16>
    %100 = arith.truncf %79 : vector<4x256xf32> to vector<4x256xbf16>
    %c255_i32_27 = arith.constant 255 : i32
    %101 = tpu.dynamic_rotate %79 by %c255_i32_27 dim 1 : vector<4x256xf32>, i32 -> vector<4x256xf32>
    %102 = arith.truncf %101 : vector<4x256xf32> to vector<4x256xbf16>
    %103 = vector.extract_strided_slice %2 {offsets = [5, 0], sizes = [1, 256], strides = [1, 1]} : vector<9x256xbf16> to vector<1x256xbf16>
    %104 = vector.broadcast %103 : vector<1x256xbf16> to vector<4x256xbf16>
    %105 = arith.mulf %102, %104 : vector<4x256xbf16>
    %c241_i32_28 = arith.constant 241 : i32
    %106 = tpu.dynamic_rotate %79 by %c241_i32_28 dim 1 : vector<4x256xf32>, i32 -> vector<4x256xf32>
    %107 = arith.truncf %106 : vector<4x256xf32> to vector<4x256xbf16>
    %108 = vector.extract_strided_slice %2 {offsets = [6, 0], sizes = [1, 256], strides = [1, 1]} : vector<9x256xbf16> to vector<1x256xbf16>
    %109 = vector.broadcast %108 : vector<1x256xbf16> to vector<4x256xbf16>
    %110 = arith.mulf %107, %109 : vector<4x256xbf16>
    %c240_i32_29 = arith.constant 240 : i32
    %111 = tpu.dynamic_rotate %79 by %c240_i32_29 dim 1 : vector<4x256xf32>, i32 -> vector<4x256xf32>
    %112 = arith.truncf %111 : vector<4x256xf32> to vector<4x256xbf16>
    %113 = vector.extract_strided_slice %2 {offsets = [7, 0], sizes = [1, 256], strides = [1, 1]} : vector<9x256xbf16> to vector<1x256xbf16>
    %114 = vector.broadcast %113 : vector<1x256xbf16> to vector<4x256xbf16>
    %115 = arith.mulf %112, %114 : vector<4x256xbf16>
    %c239_i32_30 = arith.constant 239 : i32
    %116 = tpu.dynamic_rotate %79 by %c239_i32_30 dim 1 : vector<4x256xf32>, i32 -> vector<4x256xf32>
    %117 = arith.truncf %116 : vector<4x256xf32> to vector<4x256xbf16>
    %118 = vector.extract_strided_slice %2 {offsets = [8, 0], sizes = [1, 256], strides = [1, 1]} : vector<9x256xbf16> to vector<1x256xbf16>
    %119 = vector.broadcast %118 : vector<1x256xbf16> to vector<4x256xbf16>
    %120 = arith.mulf %117, %119 : vector<4x256xbf16>
    %121 = tpu.concatenate %84, %89, %94, %99, %100, %105, %110, %115, %120 in 0 : vector<4x256xbf16>, vector<4x256xbf16>, vector<4x256xbf16>, vector<4x256xbf16>, vector<4x256xbf16>, vector<4x256xbf16>, vector<4x256xbf16>, vector<4x256xbf16>, vector<4x256xbf16> -> vector<36x256xbf16>
    %c0_31 = arith.constant 0 : index
    %c0_32 = arith.constant 0 : index
    %122 = vector.load %arg8[%c0_31, %c0_32] : memref<8x36xbf16, #tpu.memory_space<vmem>>, vector<8x36xbf16>
    %cst_33 = arith.constant dense<0.000000e+00> : vector<8x256xf32>
    %123 = tpu.matmul %122, %121, %cst_33 {dimension_numbers = #tpu.dot_dimension_numbers<[1], [0], [0], [1], [0, 0, 1, 1], [], []>} : vector<8x36xbf16>, vector<36x256xbf16>, vector<8x256xf32> -> vector<8x256xf32>
    %c0_34 = arith.constant 0 : index
    %c0_35 = arith.constant 0 : index
    %124 = vector.load %arg9[%c0_34, %c0_35] : memref<8x1xf32, #tpu.memory_space<vmem>>, vector<8x1xf32>
    %c0_36 = arith.constant 0 : index
    %c0_37 = arith.constant 0 : index
    %125 = vector.load %arg10[%c0_36, %c0_37] : memref<8x1xf32, #tpu.memory_space<vmem>>, vector<8x1xf32>
    %c0_38 = arith.constant 0 : index
    %c0_39 = arith.constant 0 : index
    %126 = vector.load %arg11[%c0_38, %c0_39] : memref<8x8xf32, #tpu.memory_space<vmem>>, vector<8x8xf32>
    %cst_40 = arith.constant dense<0.000000e+00> : vector<8xf32>
    %127 = vector.multi_reduction <add>, %123, %cst_40 [1] : vector<8x256xf32> to vector<8xf32>
    %128 = vector.shape_cast %127 : vector<8xf32> to vector<8x1xf32>
    %cst_41 = arith.constant dense<0.000000e+00> : vector<8x1xf32>
    %129 = tpu.matmul %126, %128, %cst_41 {dimension_numbers = #tpu.dot_dimension_numbers<[1], [0], [0], [1], [0, 0, 1, 1], [], []>} : vector<8x8xf32>, vector<8x1xf32>, vector<8x1xf32> -> vector<8x1xf32>
    %130 = vector.broadcast %129 : vector<8x1xf32> to vector<8x256xf32>
    %131 = arith.subf %123, %130 : vector<8x256xf32>
    %132 = arith.mulf %131, %131 : vector<8x256xf32>
    %cst_42 = arith.constant dense<0.000000e+00> : vector<8xf32>
    %133 = vector.multi_reduction <add>, %132, %cst_42 [1] : vector<8x256xf32> to vector<8xf32>
    %134 = vector.shape_cast %133 : vector<8xf32> to vector<8x1xf32>
    %cst_43 = arith.constant dense<0.000000e+00> : vector<8x1xf32>
    %135 = tpu.matmul %126, %134, %cst_43 {dimension_numbers = #tpu.dot_dimension_numbers<[1], [0], [0], [1], [0, 0, 1, 1], [], []>} : vector<8x8xf32>, vector<8x1xf32>, vector<8x1xf32> -> vector<8x1xf32>
    %cst_44 = arith.constant 9.99999974E-6 : f32
    %136 = vector.broadcast %cst_44 : f32 to vector<8x1xf32>
    %137 = arith.addf %135, %136 : vector<8x1xf32>
    %138 = math.rsqrt %137 : vector<8x1xf32>
    %139 = arith.mulf %138, %124 : vector<8x1xf32>
    %140 = vector.broadcast %139 : vector<8x1xf32> to vector<8x256xf32>
    %141 = arith.mulf %131, %140 : vector<8x256xf32>
    %142 = vector.broadcast %125 : vector<8x1xf32> to vector<8x256xf32>
    %143 = arith.addf %141, %142 : vector<8x256xf32>
    %c0_45 = arith.constant 0 : index
    %c0_46 = arith.constant 0 : index
    %144 = vector.load %arg12[%c0_45, %c0_46] : memref<8x4xbf16, #tpu.memory_space<vmem>>, vector<8x4xbf16>
    %145 = arith.truncf %1 : vector<4x256xf32> to vector<4x256xbf16>
    %cst_47 = arith.constant dense<0.000000e+00> : vector<8x256xf32>
    %146 = tpu.matmul %144, %145, %cst_47 {dimension_numbers = #tpu.dot_dimension_numbers<[1], [0], [0], [1], [0, 0, 1, 1], [], []>} : vector<8x4xbf16>, vector<4x256xbf16>, vector<8x256xf32> -> vector<8x256xf32>
    %cst_48 = arith.constant 1.000000e-01 : f32
    %147 = vector.broadcast %cst_48 : f32 to vector<8x256xf32>
    %148 = arith.mulf %147, %143 : vector<8x256xf32>
    %149 = arith.addf %146, %148 : vector<8x256xf32>
    %c0_49 = arith.constant 0 : index
    %c0_50 = arith.constant 0 : index
    %c0_51 = arith.constant 0 : index
    %150 = vector.load %arg13[%c0_49, %c0_50, %c0_51] : memref<1x8x256xf32, #tpu.memory_space<vmem>>, vector<1x8x256xf32>
    %151 = vector.shape_cast %150 : vector<1x8x256xf32> to vector<8x256xf32>
    %152 = vector.shape_cast %149 : vector<8x256xf32> to vector<1x8x256xf32>
    tpu.vector_store %arg13[%c0_49, %c0_50, %c0_51], %152 {strides = array<i32>} : memref<1x8x256xf32, #tpu.memory_space<vmem>>, vector<1x8x256xf32>,
    return
  }
  func.func @transform_0(%arg0: i32) -> (i32, i32, i32) {
    %c0_i32 = arith.constant 0 : i32
    %c0_i32_0 = arith.constant 0 : i32
    %c0_i32_1 = arith.constant 0 : i32
    return %arg0, %c0_i32, %c0_i32_0 : i32, i32, i32
  }
  func.func @transform_1(%arg0: i32) -> (i32, i32) {
    %c0_i32 = arith.constant 0 : i32
    %c0_i32_0 = arith.constant 0 : i32
    %c0_i32_1 = arith.constant 0 : i32
    return %c0_i32, %c0_i32_0 : i32, i32
  }
  func.func @transform_2(%arg0: i32) -> (i32, i32) {
    %c0_i32 = arith.constant 0 : i32
    %c0_i32_0 = arith.constant 0 : i32
    %c0_i32_1 = arith.constant 0 : i32
    return %c0_i32, %c0_i32_0 : i32, i32
  }
  func.func @transform_3(%arg0: i32) -> (i32, i32) {
    %c0_i32 = arith.constant 0 : i32
    %c0_i32_0 = arith.constant 0 : i32
    %c0_i32_1 = arith.constant 0 : i32
    return %c0_i32, %c0_i32_0 : i32, i32
  }
  func.func @transform_4(%arg0: i32) -> (i32, i32) {
    %c0_i32 = arith.constant 0 : i32
    %c0_i32_0 = arith.constant 0 : i32
    %c0_i32_1 = arith.constant 0 : i32
    return %c0_i32, %c0_i32_0 : i32, i32
  }
  func.func @transform_5(%arg0: i32) -> (i32, i32) {
    %c0_i32 = arith.constant 0 : i32
    %c0_i32_0 = arith.constant 0 : i32
    %c0_i32_1 = arith.constant 0 : i32
    return %c0_i32, %c0_i32_0 : i32, i32
  }
  func.func @transform_6(%arg0: i32) -> (i32, i32) {
    %c0_i32 = arith.constant 0 : i32
    %c0_i32_0 = arith.constant 0 : i32
    %c0_i32_1 = arith.constant 0 : i32
    return %c0_i32, %c0_i32_0 : i32, i32
  }
  func.func @transform_7(%arg0: i32) -> (i32, i32) {
    %c0_i32 = arith.constant 0 : i32
    %c0_i32_0 = arith.constant 0 : i32
    %c0_i32_1 = arith.constant 0 : i32
    return %c0_i32, %c0_i32_0 : i32, i32
  }
  func.func @transform_8(%arg0: i32) -> (i32, i32) {
    %c0_i32 = arith.constant 0 : i32
    %c0_i32_0 = arith.constant 0 : i32
    %c0_i32_1 = arith.constant 0 : i32
    return %c0_i32, %c0_i32_0 : i32, i32
  }
  func.func @transform_9(%arg0: i32) -> (i32, i32) {
    %c0_i32 = arith.constant 0 : i32
    %c0_i32_0 = arith.constant 0 : i32
    %c0_i32_1 = arith.constant 0 : i32
    return %c0_i32, %c0_i32_0 : i32, i32
  }
  func.func @transform_10(%arg0: i32) -> (i32, i32) {
    %c0_i32 = arith.constant 0 : i32
    %c0_i32_0 = arith.constant 0 : i32
    %c0_i32_1 = arith.constant 0 : i32
    return %c0_i32, %c0_i32_0 : i32, i32
  }
  func.func @transform_11(%arg0: i32) -> (i32, i32) {
    %c0_i32 = arith.constant 0 : i32
    %c0_i32_0 = arith.constant 0 : i32
    %c0_i32_1 = arith.constant 0 : i32
    return %c0_i32, %c0_i32_0 : i32, i32
  }
  func.func @transform_12(%arg0: i32) -> (i32, i32, i32) {
    %c0_i32 = arith.constant 0 : i32
    %c0_i32_0 = arith.constant 0 : i32
    %c0_i32_1 = arith.constant 0 : i32
    return %arg0, %c0_i32, %c0_i32_0 : i32, i32, i32
  }
}

</mosaic_0001>

<llo_original>
// kernel: tpu_custom_call.1
$region0: #{tpu_custom_call.1}
  #allocation0 [shape = 'u32[]', space=smem, size = 0x4, offset = 0x4, fixed_abs, tag = 'smem constant byte address 0x4 - core index']
  #allocation1 [shape = 'u32[144,128]{1,0:T(1,128)}', space=vmem, size = 0x12000, scoped, tag = 'internal scratch']
  %s0 = inlined_call_operand.vmem [shape: f32[2,4,256], index: 0, kind: input, shape index: {}]
  %s1 = inlined_call_operand.vmem [shape: bf16[9,256], index: 1, kind: input, shape index: {}]
  %s2 = inlined_call_operand.vmem [shape: bf16[4,36], index: 2, kind: input, shape index: {}]
  %s3 = inlined_call_operand.vmem [shape: f32[4,1], index: 3, kind: input, shape index: {}]
  %s4 = inlined_call_operand.vmem [shape: f32[4,1], index: 4, kind: input, shape index: {}]
  %s5 = inlined_call_operand.vmem [shape: f32[4,1], index: 5, kind: input, shape index: {}]
  %s6 = inlined_call_operand.vmem [shape: f32[4,4], index: 6, kind: input, shape index: {}]
  %s7 = inlined_call_operand.vmem [shape: bf16[8,36], index: 7, kind: input, shape index: {}]
  %s8 = inlined_call_operand.vmem [shape: f32[8,1], index: 8, kind: input, shape index: {}]
  %s9 = inlined_call_operand.vmem [shape: f32[8,1], index: 9, kind: input, shape index: {}]
  %s10 = inlined_call_operand.vmem [shape: f32[8,8], index: 10, kind: input, shape index: {}]
  %s11 = inlined_call_operand.vmem [shape: bf16[8,4], index: 11, kind: input, shape index: {}]
  %s12 = inlined_call_operand.hbm [shape: f32[2,8,256], index: 12, kind: output, shape index: {}]
  %s13 = sld [smem:[#allocation0]]
  $region81: #{tpu_custom_call.1} parent=0
    _
  %s15 = ssub.s32 1, %s13
  %s16 = scalar_select 0, %s15, %s13
  $region1: #{tpu_custom_call.1} parent=0
    #allocation2 [shape = 'u8[16384]{0}', space=vmem, size = 0x4000, scoped, tag = 'output window, operand 0']
    #allocation3 [shape = 's32[2]{0}', space=sflag, size = 0x8, scoped, tag = 'scoped memory for tpu_custom_call.1']
    %17 = vsyncpa [#allocation3], 0
    %s18 = scalar_lea.sflag [#allocation3], 1
    %19 = vsyncpa %s18, 0
    loop: start=0, step=1, limit=4
    $region2: #{tpu_custom_call.1} parent=1 // loop_pre_header
      _
    $region3: #{tpu_custom_call.1} parent=1 // loop_header
      %s21 = sphi 0, %s25
      %p22 = scmp.ge.s32.totalorder %s21, 4
      %s31 = sphi 0, %s33
      %s34 = sphi 0, %s31
      %s35 = sphi 0, %s34
      %s51 = sphi 0, %s35
      %s55 = sphi 0, %s55
      %s57 = sphi 0, %s55
      %s58 = sphi 0, %s57
      %s72 = sphi 0, %s58
      %s76 = sphi 0, %s76
      %s78 = sphi 0, %s76
      %s79 = sphi 0, %s78
      %s93 = sphi 0, %s79
      %s97 = sphi 0, %s97
      %s99 = sphi 0, %s97
      %s100 = sphi 0, %s99
      %s114 = sphi 0, %s100
      %s118 = sphi 0, %s118
      %s120 = sphi 0, %s118
      %s121 = sphi 0, %s120
      %s135 = sphi 0, %s121
      %s139 = sphi 0, %s139
      %s141 = sphi 0, %s139
      %s142 = sphi 0, %s141
      %s156 = sphi 0, %s142
      %s160 = sphi 0, %s160
      %s162 = sphi 0, %s160
      %s163 = sphi 0, %s162
      %s177 = sphi 0, %s163
      %s181 = sphi 0, %s181
      %s183 = sphi 0, %s181
      %s184 = sphi 0, %s183
      %s198 = sphi 0, %s184
      %s202 = sphi 0, %s202
      %s204 = sphi 0, %s202
      %s205 = sphi 0, %s204
      %s219 = sphi 0, %s205
      %s223 = sphi 0, %s223
      %s225 = sphi 0, %s223
      %s226 = sphi 0, %s225
      %s240 = sphi 0, %s226
      %s244 = sphi 0, %s244
      %s246 = sphi 0, %s244
      %s247 = sphi 0, %s246
      %s261 = sphi 0, %s247
      %s265 = sphi 0, %s265
      %s267 = sphi 0, %s265
      %s268 = sphi 0, %s267
      %s282 = sphi 0, %s268
      %s288 = sphi 0, %s290
      %s291 = sphi 0, %s288
      %s292 = sphi 0, %s291
      %s308 = sphi 0, %s292
    $region4: #{tpu_custom_call.1} parent=1 // loop_header_branch
      %24 = sbr.rel (%p22) target = $region8
    $region5: #{tpu_custom_call.1} parent=1 // loop_body
      %s26 = ssub.s32 %s21, 1
      %s27 = ssub.s32 %s21, 2
      %s28 = sadd.s32 %s21, 1
      %s29 = ssub.s32 %s21, %s28
      %p30 = scmp.eq.s32.totalorder %s29, 0
      %s32 = sadd.s32 %s31, 1
      %s33 = scalar_select %p30, %s31, %s32
      %p36 = pneg %p30
      %p37 = scmp.eq.s32.totalorder %s21, 1
      %p38 = por %p36, %p37
      %p39 = scmp.ne.s32.totalorder %s31, %s34
      %p40 = scmp.eq.s32.totalorder %s21, 0
      %p41 = por %p39, %p40
      %p42 = scmp.ne.s32.totalorder %s31, %s34
      %p43 = scmp.eq.s32.totalorder %s26, 1
      %p44 = por %p42, %p43
      %p45 = scmp.ne.s32.totalorder %s34, %s35
      %p46 = scmp.eq.s32.totalorder %s26, 0
      %p47 = por %p45, %p46
      %p48 = scmp.ne.s32.totalorder %s34, %s35
      %p49 = scmp.eq.s32.totalorder %s27, 1
      %p50 = por %p48, %p49
      %p52 = scmp.ne.s32.totalorder %s35, %s51
      %p53 = scmp.eq.s32.totalorder %s27, 0
      %p54 = por %p52, %p53
      %s56 = sadd.s32 %s55, 1
      %p59 = scmp.eq.s32.totalorder %s21, 1
      %p60 = scmp.ne.s32.totalorder %s55, %s57
      %p61 = scmp.eq.s32.totalorder %s21, 0
      %p62 = por %p60, %p61
      %p63 = scmp.ne.s32.totalorder %s55, %s57
      %p64 = scmp.eq.s32.totalorder %s26, 1
      %p65 = por %p63, %p64
      %p66 = scmp.ne.s32.totalorder %s57, %s58
      %p67 = scmp.eq.s32.totalorder %s26, 0
      %p68 = por %p66, %p67
      %p69 = scmp.ne.s32.totalorder %s57, %s58
      %p70 = scmp.eq.s32.totalorder %s27, 1
      %p71 = por %p69, %p70
      %p73 = scmp.ne.s32.totalorder %s58, %s72
      %p74 = scmp.eq.s32.totalorder %s27, 0
      %p75 = por %p73, %p74
      %s77 = sadd.s32 %s76, 1
      %p80 = scmp.eq.s32.totalorder %s21, 1
      %p81 = scmp.ne.s32.totalorder %s76, %s78
      %p82 = scmp.eq.s32.totalorder %s21, 0
      %p83 = por %p81, %p82
      %p84 = scmp.ne.s32.totalorder %s76, %s78
      %p85 = scmp.eq.s32.totalorder %s26, 1
      %p86 = por %p84, %p85
      %p87 = scmp.ne.s32.totalorder %s78, %s79
      %p88 = scmp.eq.s32.totalorder %s26, 0
      %p89 = por %p87, %p88
      %p90 = scmp.ne.s32.totalorder %s78, %s79
      %p91 = scmp.eq.s32.totalorder %s27, 1
      %p92 = por %p90, %p91
      %p94 = scmp.ne.s32.totalorder %s79, %s93
      %p95 = scmp.eq.s32.totalorder %s27, 0
      %p96 = por %p94, %p95
      %s98 = sadd.s32 %s97, 1
      %p101 = scmp.eq.s32.totalorder %s21, 1
      %p102 = scmp.ne.s32.totalorder %s97, %s99
      %p103 = scmp.eq.s32.totalorder %s21, 0
      %p104 = por %p102, %p103
      %p105 = scmp.ne.s32.totalorder %s97, %s99
      %p106 = scmp.eq.s32.totalorder %s26, 1
      %p107 = por %p105, %p106
      %p108 = scmp.ne.s32.totalorder %s99, %s100
      %p109 = scmp.eq.s32.totalorder %s26, 0
      %p110 = por %p108, %p109
      %p111 = scmp.ne.s32.totalorder %s99, %s100
      %p112 = scmp.eq.s32.totalorder %s27, 1
      %p113 = por %p111, %p112
      %p115 = scmp.ne.s32.totalorder %s100, %s114
      %p116 = scmp.eq.s32.totalorder %s27, 0
      %p117 = por %p115, %p116
      %s119 = sadd.s32 %s118, 1
      %p122 = scmp.eq.s32.totalorder %s21, 1
      %p123 = scmp.ne.s32.totalorder %s118, %s120
      %p124 = scmp.eq.s32.totalorder %s21, 0
      %p125 = por %p123, %p124
      %p126 = scmp.ne.s32.totalorder %s118, %s120
      %p127 = scmp.eq.s32.totalorder %s26, 1
      %p128 = por %p126, %p127
      %p129 = scmp.ne.s32.totalorder %s120, %s121
      %p130 = scmp.eq.s32.totalorder %s26, 0
      %p131 = por %p129, %p130
      %p132 = scmp.ne.s32.totalorder %s120, %s121
      %p133 = scmp.eq.s32.totalorder %s27, 1
      %p134 = por %p132, %p133
      %p136 = scmp.ne.s32.totalorder %s121, %s135
      %p137 = scmp.eq.s32.totalorder %s27, 0
      %p138 = por %p136, %p137
      %s140 = sadd.s32 %s139, 1
      %p143 = scmp.eq.s32.totalorder %s21, 1
      %p144 = scmp.ne.s32.totalorder %s139, %s141
      %p145 = scmp.eq.s32.totalorder %s21, 0
      %p146 = por %p144, %p145
      %p147 = scmp.ne.s32.totalorder %s139, %s141
      %p148 = scmp.eq.s32.totalorder %s26, 1
      %p149 = por %p147, %p148
      %p150 = scmp.ne.s32.totalorder %s141, %s142
      %p151 = scmp.eq.s32.totalorder %s26, 0
      %p152 = por %p150, %p151
      %p153 = scmp.ne.s32.totalorder %s141, %s142
      %p154 = scmp.eq.s32.totalorder %s27, 1
      %p155 = por %p153, %p154
      %p157 = scmp.ne.s32.totalorder %s142, %s156
      %p158 = scmp.eq.s32.totalorder %s27, 0
      %p159 = por %p157, %p158
      %s161 = sadd.s32 %s160, 1
      %p164 = scmp.eq.s32.totalorder %s21, 1
      %p165 = scmp.ne.s32.totalorder %s160, %s162
      %p166 = scmp.eq.s32.totalorder %s21, 0
      %p167 = por %p165, %p166
      %p168 = scmp.ne.s32.totalorder %s160, %s162
      %p169 = scmp.eq.s32.totalorder %s26, 1
      %p170 = por %p168, %p169
      %p171 = scmp.ne.s32.totalorder %s162, %s163
      %p172 = scmp.eq.s32.totalorder %s26, 0
      %p173 = por %p171, %p172
      %p174 = scmp.ne.s32.totalorder %s162, %s163
      %p175 = scmp.eq.s32.totalorder %s27, 1
      %p176 = por %p174, %p175
      %p178 = scmp.ne.s32.totalorder %s163, %s177
      %p179 = scmp.eq.s32.totalorder %s27, 0
      %p180 = por %p178, %p179
      %s182 = sadd.s32 %s181, 1
      %p185 = scmp.eq.s32.totalorder %s21, 1
      %p186 = scmp.ne.s32.totalorder %s181, %s183
      %p187 = scmp.eq.s32.totalorder %s21, 0
      %p188 = por %p186, %p187
      %p189 = scmp.ne.s32.totalorder %s181, %s183
      %p190 = scmp.eq.s32.totalorder %s26, 1
      %p191 = por %p189, %p190
      %p192 = scmp.ne.s32.totalorder %s183, %s184
      %p193 = scmp.eq.s32.totalorder %s26, 0
      %p194 = por %p192, %p193
      %p195 = scmp.ne.s32.totalorder %s183, %s184
      %p196 = scmp.eq.s32.totalorder %s27, 1
      %p197 = por %p195, %p196
      %p199 = scmp.ne.s32.totalorder %s184, %s198
      %p200 = scmp.eq.s32.totalorder %s27, 0
      %p201 = por %p199, %p200
      %s203 = sadd.s32 %s202, 1
      %p206 = scmp.eq.s32.totalorder %s21, 1
      %p207 = scmp.ne.s32.totalorder %s202, %s204
      %p208 = scmp.eq.s32.totalorder %s21, 0
      %p209 = por %p207, %p208
      %p210 = scmp.ne.s32.totalorder %s202, %s204
      %p211 = scmp.eq.s32.totalorder %s26, 1
      %p212 = por %p210, %p211
      %p213 = scmp.ne.s32.totalorder %s204, %s205
      %p214 = scmp.eq.s32.totalorder %s26, 0
      %p215 = por %p213, %p214
      %p216 = scmp.ne.s32.totalorder %s204, %s205
      %p217 = scmp.eq.s32.totalorder %s27, 1
      %p218 = por %p216, %p217
      %p220 = scmp.ne.s32.totalorder %s205, %s219
      %p221 = scmp.eq.s32.totalorder %s27, 0
      %p222 = por %p220, %p221
      %s224 = sadd.s32 %s223, 1
      %p227 = scmp.eq.s32.totalorder %s21, 1
      %p228 = scmp.ne.s32.totalorder %s223, %s225
      %p229 = scmp.eq.s32.totalorder %s21, 0
      %p230 = por %p228, %p229
      %p231 = scmp.ne.s32.totalorder %s223, %s225
      %p232 = scmp.eq.s32.totalorder %s26, 1
      %p233 = por %p231, %p232
      %p234 = scmp.ne.s32.totalorder %s225, %s226
      %p235 = scmp.eq.s32.totalorder %s26, 0
      %p236 = por %p234, %p235
      %p237 = scmp.ne.s32.totalorder %s225, %s226
      %p238 = scmp.eq.s32.totalorder %s27, 1
      %p239 = por %p237, %p238
      %p241 = scmp.ne.s32.totalorder %s226, %s240
      %p242 = scmp.eq.s32.totalorder %s27, 0
      %p243 = por %p241, %p242
      %s245 = sadd.s32 %s244, 1
      %p248 = scmp.eq.s32.totalorder %s21, 1
      %p249 = scmp.ne.s32.totalorder %s244, %s246
      %p250 = scmp.eq.s32.totalorder %s21, 0
      %p251 = por %p249, %p250
      %p252 = scmp.ne.s32.totalorder %s244, %s246
      %p253 = scmp.eq.s32.totalorder %s26, 1
      %p254 = por %p252, %p253
      %p255 = scmp.ne.s32.totalorder %s246, %s247
      %p256 = scmp.eq.s32.totalorder %s26, 0
      %p257 = por %p255, %p256
      %p258 = scmp.ne.s32.totalorder %s246, %s247
      %p259 = scmp.eq.s32.totalorder %s27, 1
      %p260 = por %p258, %p259
      %p262 = scmp.ne.s32.totalorder %s247, %s261
      %p263 = scmp.eq.s32.totalorder %s27, 0
      %p264 = por %p262, %p263
      %s266 = sadd.s32 %s265, 1
      %p269 = scmp.eq.s32.totalorder %s21, 1
      %p270 = scmp.ne.s32.totalorder %s265, %s267
      %p271 = scmp.eq.s32.totalorder %s21, 0
      %p272 = por %p270, %p271
      %p273 = scmp.ne.s32.totalorder %s265, %s267
      %p274 = scmp.eq.s32.totalorder %s26, 1
      %p275 = por %p273, %p274
      %p276 = scmp.ne.s32.totalorder %s267, %s268
      %p277 = scmp.eq.s32.totalorder %s26, 0
      %p278 = por %p276, %p277
      %p279 = scmp.ne.s32.totalorder %s267, %s268
      %p280 = scmp.eq.s32.totalorder %s27, 1
      %p281 = por %p279, %p280
      %p283 = scmp.ne.s32.totalorder %s268, %s282
      %p284 = scmp.eq.s32.totalorder %s27, 0
      %p285 = por %p283, %p284
      %s286 = ssub.s32 %s21, %s28
      %p287 = scmp.eq.s32.totalorder %s286, 0
      %s289 = sadd.s32 %s288, 1
      %s290 = scalar_select %p287, %s288, %s289
      %p293 = pneg %p287
      %p294 = scmp.eq.s32.totalorder %s21, 1
      %p295 = por %p293, %p294
      %p296 = scmp.ne.s32.totalorder %s288, %s291
      %p297 = scmp.eq.s32.totalorder %s21, 0
      %p298 = por %p296, %p297
      %p299 = scmp.ne.s32.totalorder %s288, %s291
      %p300 = scmp.eq.s32.totalorder %s26, 1
      %p301 = por %p299, %p300
      %p302 = scmp.ne.s32.totalorder %s291, %s292
      %p303 = scmp.eq.s32.totalorder %s26, 0
      %p304 = por %p302, %p303
      %p305 = scmp.ne.s32.totalorder %s291, %s292
      %p306 = scmp.eq.s32.totalorder %s27, 1
      %p307 = por %p305, %p306
      %p309 = scmp.ne.s32.totalorder %s292, %s308
      %p310 = scmp.eq.s32.totalorder %s27, 0
      %p311 = por %p309, %p310
      %p312 = scmp.le.s32.totalorder 1, %s21
      %p313 = scmp.lt.s32.totalorder %s21, 3
      %p314 = pnand %p312, %p313
      %p315 = pneg %p314
      // Predicated region
      $region9: #{tpu_custom_call.1} parent=5 // pred_check
        _
      $region10: #{tpu_custom_call.1} parent=5 // pred_check_branch
        %317 = sbr.rel (%p314) target = $region12
      $region11: #{tpu_custom_call.1} parent=5 // pred_region
        %s318 = ssub.s32 %s21, 1
        // Predicated region
        $region13: #{tpu_custom_call.1} parent=11 // pred_check
          %p319 = pneg %p68
        $region14: #{tpu_custom_call.1} parent=11 // pred_check_branch
          %321 = sbr.rel (%p319) target = $region16
        $region15: #{tpu_custom_call.1} parent=11 // pred_region
          _
        $region16: #{tpu_custom_call.1} parent=11 // pred_fallthru
          _
        // Predicated region
        $region17: #{tpu_custom_call.1} parent=11 // pred_check
          %p322 = pneg %p89
        $region18: #{tpu_custom_call.1} parent=11 // pred_check_branch
          %324 = sbr.rel (%p322) target = $region20
        $region19: #{tpu_custom_call.1} parent=11 // pred_region
          _
        $region20: #{tpu_custom_call.1} parent=11 // pred_fallthru
          _
        // Predicated region
        $region21: #{tpu_custom_call.1} parent=11 // pred_check
          %p325 = pneg %p110
        $region22: #{tpu_custom_call.1} parent=11 // pred_check_branch
          %327 = sbr.rel (%p325) target = $region24
        $region23: #{tpu_custom_call.1} parent=11 // pred_region
          _
        $region24: #{tpu_custom_call.1} parent=11 // pred_fallthru
          _
        // Predicated region
        $region25: #{tpu_custom_call.1} parent=11 // pred_check
          %p328 = pneg %p131
        $region26: #{tpu_custom_call.1} parent=11 // pred_check_branch
          %330 = sbr.rel (%p328) target = $region28
        $region27: #{tpu_custom_call.1} parent=11 // pred_region
          _
        $region28: #{tpu_custom_call.1} parent=11 // pred_fallthru
          _
        // Predicated region
        $region29: #{tpu_custom_call.1} parent=11 // pred_check
          %p331 = pneg %p152
        $region30: #{tpu_custom_call.1} parent=11 // pred_check_branch
          %333 = sbr.rel (%p331) target = $region32
        $region31: #{tpu_custom_call.1} parent=11 // pred_region
          _
        $region32: #{tpu_custom_call.1} parent=11 // pred_fallthru
          _
        // Predicated region
        $region33: #{tpu_custom_call.1} parent=11 // pred_check
          %p334 = pneg %p173
        $region34: #{tpu_custom_call.1} parent=11 // pred_check_branch
          %336 = sbr.rel (%p334) target = $region36
        $region35: #{tpu_custom_call.1} parent=11 // pred_region
          _
        $region36: #{tpu_custom_call.1} parent=11 // pred_fallthru
          _
        // Predicated region
        $region37: #{tpu_custom_call.1} parent=11 // pred_check
          %p337 = pneg %p194
        $region38: #{tpu_custom_call.1} parent=11 // pred_check_branch
          %339 = sbr.rel (%p337) target = $region40
        $region39: #{tpu_custom_call.1} parent=11 // pred_region
          _
        $region40: #{tpu_custom_call.1} parent=11 // pred_fallthru
          _
        // Predicated region
        $region41: #{tpu_custom_call.1} parent=11 // pred_check
          %p340 = pneg %p215
        $region42: #{tpu_custom_call.1} parent=11 // pred_check_branch
          %342 = sbr.rel (%p340) target = $region44
        $region43: #{tpu_custom_call.1} parent=11 // pred_region
          _
        $region44: #{tpu_custom_call.1} parent=11 // pred_fallthru
          _
        // Predicated region
        $region45: #{tpu_custom_call.1} parent=11 // pred_check
          %p343 = pneg %p236
        $region46: #{tpu_custom_call.1} parent=11 // pred_check_branch
          %345 = sbr.rel (%p343) target = $region48
        $region47: #{tpu_custom_call.1} parent=11 // pred_region
          _
        $region48: #{tpu_custom_call.1} parent=11 // pred_fallthru
          _
        // Predicated region
        $region49: #{tpu_custom_call.1} parent=11 // pred_check
          %p346 = pneg %p257
        $region50: #{tpu_custom_call.1} parent=11 // pred_check_branch
          %348 = sbr.rel (%p346) target = $region52
        $region51: #{tpu_custom_call.1} parent=11 // pred_region
          _
        $region52: #{tpu_custom_call.1} parent=11 // pred_fallthru
          _
        // Predicated region
        $region53: #{tpu_custom_call.1} parent=11 // pred_check
          %p349 = pneg %p278
        $region54: #{tpu_custom_call.1} parent=11 // pred_check_branch
          %351 = sbr.rel (%p349) target = $region56
        $region55: #{tpu_custom_call.1} parent=11 // pred_region
          _
        $region56: #{tpu_custom_call.1} parent=11 // pred_fallthru
          _
      $region12: #{tpu_custom_call.1} parent=5 // pred_fallthru
        _
      %p352 = scmp.lt.s32.totalorder %s21, 2
      // Predicated region
      $region57: #{tpu_custom_call.1} parent=5 // pred_check
        %p353 = pneg %p352
      $region58: #{tpu_custom_call.1} parent=5 // pred_check_branch
        %355 = sbr.rel (%p353) target = $region60
      $region59: #{tpu_custom_call.1} parent=5 // pred_region
        // Predicated region
        $region61: #{tpu_custom_call.1} parent=59 // pred_check
          %p356 = pneg %p41
        $region62: #{tpu_custom_call.1} parent=59 // pred_check_branch
          %358 = sbr.rel (%p356) target = $region64
        $region63: #{tpu_custom_call.1} parent=59 // pred_region
          %p359 = scmp.lt.s32.totalorder %s21, 1
          %s360 = scalar_select %p359, %s21, 1
          %s361 = smul.addr %s360, 2
          %s362 = smul.addr %s361, 4
          %s363 = scalar_lea.vmem %s0, %s362
        $region64: #{tpu_custom_call.1} parent=59 // pred_fallthru
          _
      $region60: #{tpu_custom_call.1} parent=5 // pred_fallthru
        _
      %p364 = scmp.le.s32.totalorder 1, %s21
      %p365 = scmp.lt.s32.totalorder %s21, 3
      %p366 = pnand %p364, %p365
      %p367 = pneg %p366
      // Predicated region
      $region65: #{tpu_custom_call.1} parent=5 // pred_check
        _
      $region66: #{tpu_custom_call.1} parent=5 // pred_check_branch
        %369 = sbr.rel (%p366) target = $region68
      $region67: #{tpu_custom_call.1} parent=5 // pred_region
        %s370 = ssub.s32 %s21, 1
        %p371 = scmp.lt.s32.totalorder %s26, 1
        %s372 = scalar_select %p371, %s26, 1
        %s373 = smul.addr %s372, 2
        %s374 = smul.addr %s373, 4
        %s375 = scalar_lea.vmem %s0, %s374
        %p376 = pneg %p47
        %p377 = pneg %p44
        %p378 = pneg %p68
        %p379 = pneg %p65
        %p380 = pneg %p89
        %p381 = pneg %p86
        %p382 = pneg %p110
        %p383 = pneg %p107
        %p384 = pneg %p131
        %p385 = pneg %p128
        %p386 = pneg %p152
        %p387 = pneg %p149
        %p388 = pneg %p173
        %p389 = pneg %p170
        %p390 = pneg %p194
        %p391 = pneg %p191
        %p392 = pneg %p215
        %p393 = pneg %p212
        %p394 = pneg %p236
        %p395 = pneg %p233
        %p396 = pneg %p257
        %p397 = pneg %p254
        %p398 = pneg %p278
        %p399 = pneg %p275
        %p400 = pneg %p304
        %p401 = pneg %p301
        %s402 = sand.u32 %s291, 1
        %s403 = scalar_lea.sflag [#allocation3], %s402
        %s404 = sand.u32 %s291, 1
        %s405 = smul.addr %s404, 16
        %s406 = scalar_lea.vmem [#allocation2], %s405
        %p407 = scmp.lt.s32.totalorder %s26, 1
        %s408 = scalar_select %p407, %s26, 1
        %s409 = smul.addr %s408, 2
        %s410 = smul.addr %s409, 4
        %s411 = scalar_lea.vmem %s0, %s410
        %v413 = vld [vmem:[%s411] sm:$0xff]
        %v414 = vld [vmem:[%s1] sm:$0xff]
        %v415 = vld [vmem:[%s1 + $0x8] sm:$0x11]
        %vm416 = vcmp.gt.f32.partialorder %v413, 0.0
        %v417 = vmul.f32 %v413, 0.2
        %v418 = vsel %vm416, %v413, %v417
        %v420 = vcombine.high %v418, %v418
        %422 = vrot.lane.b32.xlu0 %v418, 17
        %v423 = vpop.permute.xlu0 %422
        %424 = vrot.lane.b32.xlu0 %v420, 17
        %v425 = vpop.permute.xlu0 %424
        %v426 = vlaneseq
        %v427 = vand.u32 %v426, 127
        %vm428 = vcmp.lt.s32.totalorder %v427, 17
        %v429 = vsel %vm428, %v423, %v425
        %v430 = vsel %vm428, %v425, %v423
        %v431 = vpack.c.bf16 %v430, %v430
        %v432 = vpack.c.bf16 %v429, %v429
        %v434 = vunpack.c.l.b16 %v414
        %v435 = vunpack.c.h.b16 %v414
        %v436 = vpack.c.b16 %v434, %v434
        %v437 = vpack.c.b16 %v435, %v435
        %v439 = vpack.i.b16 %v436, %v436
        %v441 = vlaneseq
        %v442 = vshrl.u32 %v441, 7
        %v443 = vsub.s32 0, %v442
        %v444 = vrot.slane %v439, %v443
        %v446 = vpack.i.b16 %v437, %v437
        %v448 = vlaneseq
        %v449 = vshrl.u32 %v448, 7
        %v450 = vsub.s32 0, %v449
        %v451 = vrot.slane %v446, %v450
        %v452 = vmul.bf16 %v431, %v444
        %v453 = vmul.bf16 %v432, %v451
        %454 = vrot.lane.b32.xlu0 %v418, 16
        %v455 = vpop.permute.xlu0 %454
        %456 = vrot.lane.b32.xlu0 %v420, 16
        %v457 = vpop.permute.xlu0 %456
        %vm458 = vcmp.lt.s32.totalorder %v427, 16
        %v459 = vsel %vm458, %v455, %v457
        %v460 = vsel %vm458, %v457, %v455
        %v461 = vpack.c.bf16 %v460, %v460
        %v462 = vpack.c.bf16 %v459, %v459
        %v463 = vshrl.u32 %v436, 16
        %v464 = vpack.i.b16 %v463, %v463
        %v466 = vlaneseq
        %v467 = vshrl.u32 %v466, 7
        %v468 = vsub.s32 0, %v467
        %v469 = vrot.slane %v464, %v468
        %v470 = vshrl.u32 %v437, 16
        %v471 = vpack.i.b16 %v470, %v470
        %v473 = vlaneseq
        %v474 = vshrl.u32 %v473, 7
        %v475 = vsub.s32 0, %v474
        %v476 = vrot.slane %v471, %v475
        %v477 = vmul.bf16 %v461, %v469
        %v478 = vmul.bf16 %v462, %v476
        %479 = vrot.lane.b32.xlu0 %v418, 15
        %v480 = vpop.permute.xlu0 %479
        %481 = vrot.lane.b32.xlu0 %v420, 15
        %v482 = vpop.permute.xlu0 %481
        %vm483 = vcmp.lt.s32.totalorder %v427, 15
        %v484 = vsel %vm483, %v480, %v482
        %v485 = vsel %vm483, %v482, %v480
        %v486 = vpack.c.bf16 %v485, %v485
        %v487 = vpack.c.bf16 %v484, %v484
        %v488 = vlaneseq
        %v489 = vshrl.u32 %v488, 7
        %v490 = vsub.s32 1, %v489
        %v491 = vrot.slane %v439, %v490
        %v492 = vlaneseq
        %v493 = vshrl.u32 %v492, 7
        %v494 = vsub.s32 1, %v493
        %v495 = vrot.slane %v446, %v494
        %v496 = vmul.bf16 %v486, %v491
        %v497 = vmul.bf16 %v487, %v495
        %498 = vrot.lane.b32.xlu0 %v418, 1
        %v499 = vpop.permute.xlu0 %498
        %500 = vrot.lane.b32.xlu0 %v420, 1
        %v501 = vpop.permute.xlu0 %500
        %vm502 = vcmp.lt.s32.totalorder %v427, 1
        %v503 = vsel %vm502, %v499, %v501
        %v504 = vsel %vm502, %v501, %v499
        %v505 = vpack.c.bf16 %v504, %v504
        %v506 = vpack.c.bf16 %v503, %v503
        %v507 = vlaneseq
        %v508 = vshrl.u32 %v507, 7
        %v509 = vsub.s32 1, %v508
        %v510 = vrot.slane %v464, %v509
        %v511 = vlaneseq
        %v512 = vshrl.u32 %v511, 7
        %v513 = vsub.s32 1, %v512
        %v514 = vrot.slane %v471, %v513
        %v515 = vmul.bf16 %v505, %v510
        %v516 = vmul.bf16 %v506, %v514
        %v517 = vpack.c.bf16 %v418, %v418
        %v518 = vpack.c.bf16 %v420, %v420
        %519 = vrot.lane.b32.xlu0 %v418, 127
        %v520 = vpop.permute.xlu0 %519
        %521 = vrot.lane.b32.xlu0 %v420, 127
        %v522 = vpop.permute.xlu0 %521
        %vm523 = vcmp.lt.s32.totalorder %v427, 127
        %v524 = vsel %vm523, %v520, %v522
        %v525 = vsel %vm523, %v522, %v520
        %v526 = vpack.c.bf16 %v524, %v524
        %v527 = vpack.c.bf16 %v525, %v525
        %v528 = vlaneseq
        %v529 = vshrl.u32 %v528, 7
        %v530 = vsub.s32 2, %v529
        %v531 = vrot.slane %v464, %v530
        %v532 = vlaneseq
        %v533 = vshrl.u32 %v532, 7
        %v534 = vsub.s32 2, %v533
        %v535 = vrot.slane %v471, %v534
        %v536 = vmul.bf16 %v526, %v531
        %v537 = vmul.bf16 %v527, %v535
        %538 = vrot.lane.b32.xlu0 %v418, 113
        %v539 = vpop.permute.xlu0 %538
        %540 = vrot.lane.b32.xlu0 %v420, 113
        %v541 = vpop.permute.xlu0 %540
        %vm542 = vcmp.lt.s32.totalorder %v427, 113
        %v543 = vsel %vm542, %v539, %v541
        %v544 = vsel %vm542, %v541, %v539
        %v545 = vpack.c.bf16 %v543, %v543
        %v546 = vpack.c.bf16 %v544, %v544
        %v547 = vlaneseq
        %v548 = vshrl.u32 %v547, 7
        %v549 = vsub.s32 3, %v548
        %v550 = vrot.slane %v439, %v549
        %v551 = vlaneseq
        %v552 = vshrl.u32 %v551, 7
        %v553 = vsub.s32 3, %v552
        %v554 = vrot.slane %v446, %v553
        %v555 = vmul.bf16 %v545, %v550
        %v556 = vmul.bf16 %v546, %v554
        %557 = vrot.lane.b32.xlu0 %v418, 112
        %v558 = vpop.permute.xlu0 %557
        %559 = vrot.lane.b32.xlu0 %v420, 112
        %v560 = vpop.permute.xlu0 %559
        %vm561 = vcmp.lt.s32.totalorder %v427, 112
        %v562 = vsel %vm561, %v558, %v560
        %v563 = vsel %vm561, %v560, %v558
        %v564 = vpack.c.bf16 %v562, %v562
        %v565 = vpack.c.bf16 %v563, %v563
        %v566 = vlaneseq
        %v567 = vshrl.u32 %v566, 7
        %v568 = vsub.s32 3, %v567
        %v569 = vrot.slane %v464, %v568
        %v570 = vlaneseq
        %v571 = vshrl.u32 %v570, 7
        %v572 = vsub.s32 3, %v571
        %v573 = vrot.slane %v471, %v572
        %v574 = vmul.bf16 %v564, %v569
        %v575 = vmul.bf16 %v565, %v573
        %576 = vrot.lane.b32.xlu0 %v418, 111
        %v577 = vpop.permute.xlu0 %576
        %578 = vrot.lane.b32.xlu0 %v420, 111
        %v579 = vpop.permute.xlu0 %578
        %vm580 = vcmp.lt.s32.totalorder %v427, 111
        %v581 = vsel %vm580, %v577, %v579
        %v582 = vsel %vm580, %v579, %v577
        %v583 = vpack.c.bf16 %v581, %v581
        %v584 = vpack.c.bf16 %v582, %v582
        %v586 = vunpack.c.l.b16 %v415
        %v587 = vunpack.c.h.b16 %v415
        %v588 = vpack.c.b16 %v586, %v586
        %v589 = vpack.c.b16 %v587, %v587
        %v591 = vpack.i.b16 %v588, %v588
        %v593 = vlaneseq
        %v594 = vshrl.u32 %v593, 7
        %v595 = vsub.s32 0, %v594
        %v596 = vrot.slane %v591, %v595
        %v598 = vpack.i.b16 %v589, %v589
        %v600 = vlaneseq
        %v601 = vshrl.u32 %v600, 7
        %v602 = vsub.s32 0, %v601
        %v603 = vrot.slane %v598, %v602
        %v604 = vmul.bf16 %v583, %v596
        %v605 = vmul.bf16 %v584, %v603
        %v608 = vrot.slane %v477, 6
        %v609 = vrot.slane %v478, 6
        %v612 = vrot.slane %v496, 4
        %v613 = vrot.slane %v497, 4
        %v616 = vrot.slane %v515, 2
        %v617 = vrot.slane %v516, 2
        %v620 = vrot.slane %v536, 6
        %v621 = vrot.slane %v537, 6
        %v624 = vrot.slane %v555, 4
        %v625 = vrot.slane %v556, 4
        %v628 = vrot.slane %v574, 2
        %v629 = vrot.slane %v575, 2
        %vm630 = vcmask 1041408
        %v633 = vsel %vm630, %v452, %v608
        %v636 = vsel %vm630, %v453, %v609
        %vm637 = vcmask 1043456
        %v639 = vsel %vm637, %v633, %v612
        %v641 = vsel %vm637, %v636, %v613
        %vm642 = vcmask 1045504
        %v644 = vsel %vm642, %v639, %v616
        %v647 = vsel %vm642, %v641, %v617
        %v651 = vsel %vm630, %v517, %v620
        %v654 = vsel %vm630, %v518, %v621
        %v656 = vsel %vm637, %v651, %v624
        %v658 = vsel %vm637, %v654, %v625
        %v660 = vsel %vm642, %v656, %v628
        %v663 = vsel %vm642, %v658, %v629
        %v665 = vld [vmem:[%s2] sm:$0x3]
        %v666 = vld [vmem:[%s3] sm:$0xf]
        %668 = vset.pattern.permute.xlu0 0
        %669 = vperm.xlu0 %668, %v666
        %v670 = vpop.permute.xlu0 %669
        %vm672 = vcmask 293888
        %v674 = vsel %vm672, %v665, 0
        %v677 = vsel %vm630, %v604, 0
        %v680 = vsel %vm630, %v605, 0
        %682 = vmatprep.subr.bf16.mxu0 %v647
        %683 = vmatpush1.bf16.msra.mxu0 %v644
        %684 = vmatprep.subr.bf16.mxu0 %v663
        %685 = vmatpush1.bf16.msra.mxu0 %v660
        %686 = vmatprep.subr.bf16.mxu0 %v680
        %687 = vmatpush1.bf16.msra.mxu0 %v677
        %688 = vmatprep.subr.bf16.mxu0 0
        %689 = vmatpush1.bf16.msra.mxu0 0
        %690 = vmatprep.subr.bf16.mxu0 0
        %691 = vmatpush1.bf16.msra.mxu0 0
        %692 = vmatprep.subr.bf16.mxu0 0
        %693 = vmatpush1.bf16.msra.mxu0 0
        %694 = vmatprep.subr.bf16.mxu0 0
        %695 = vmatpush1.bf16.msra.mxu0 0
        %696 = vmatprep.subr.bf16.mxu0 0
        %697 = vmatpush1.bf16.msra.mxu0 0
        %698 = vmatprep.subr.bf16.mxu0 0
        %699 = vmatpush1.bf16.msra.mxu0 0
        %700 = vmatprep.subr.bf16.mxu0 0
        %701 = vmatpush1.bf16.msra.mxu0 0
        %702 = vmatprep.subr.bf16.mxu0 0
        %703 = vmatpush1.bf16.msra.mxu0 0
        %704 = vmatprep.subr.bf16.mxu0 0
        %705 = vmatpush1.bf16.msra.mxu0 0
        %706 = vmatprep.subr.bf16.mxu0 0
        %707 = vmatpush1.bf16.msra.mxu0 0
        %708 = vmatprep.subr.bf16.mxu0 0
        %709 = vmatpush1.bf16.msra.mxu0 0
        %710 = vmatprep.subr.bf16.mxu0 0
        %711 = vmatpush1.bf16.msra.mxu0 0
        %712 = vmatprep.subr.bf16.mxu0 0
        %713 = vmatpush1.bf16.msra.mxu0 0
        %714 = vmatprep.mubr.bf16.mxu0 0
        %715 = vmatmul.mubr.bf16.gmra.mrb[0].mxu0 %v674
        %v716 = vpop.f32.mrb[0].mxu0
        %v717 = vadd.f32 %v670, %v716
        %v718 = vpop.f32.mrb[0].mxu0
        %v719 = vadd.f32 %v670, %v718
        %v720 = vpop.f32.mrb[0].mxu0
        %v721 = vpop.f32.mrb[0].mxu0
        %722 = vdwg.mxu0
        %v723 = vld [vmem:[%s4] sm:$0xf]
        %v724 = vld [vmem:[%s5] sm:$0xf]
        %v725 = vld [vmem:[%s6] sm:$0xf]
        %v726 = vsel %vm637, %v717, 0.0
        %v727 = vsel %vm637, %v719, 0.0
        %v728 = vadd.f32 %v726, %v727
        %729 = vadd.xlane.f32.xlu0 %v728
        %v730 = vpop.xlane.xlu0 %729
        %vm731 = vcmask 31744
        %v733 = vsel %vm731, %v725, 0
        %v736 = vsel %vm637, %v730, 0
        %738 = vmatprep.subr.mxu0 0.0
        %739 = vmatpush1.msra.mxu0 %v736
        %740 = vmatprep.subr.mxu0 0.0
        %741 = vmatpush1.msra.mxu0 0.0
        %742 = vmatprep.subr.mxu0 0.0
        %743 = vmatpush1.msra.mxu0 0.0
        %744 = vmatprep.subr.mxu0 0.0
        %745 = vmatpush1.msra.mxu0 0.0
        %746 = vmatprep.subr.mxu0 0.0
        %747 = vmatpush1.msra.mxu0 0.0
        %748 = vmatprep.subr.mxu0 0.0
        %749 = vmatpush1.msra.mxu0 0.0
        %750 = vmatprep.subr.mxu0 0.0
        %751 = vmatpush1.msra.mxu0 0.0
        %752 = vmatprep.subr.mxu0 0.0
        %753 = vmatpush1.msra.mxu0 0.0
        %754 = vmatprep.subr.mxu0 0.0
        %755 = vmatpush1.msra.mxu0 0.0
        %756 = vmatprep.subr.mxu0 0.0
        %757 = vmatpush1.msra.mxu0 0.0
        %758 = vmatprep.subr.mxu0 0.0
        %759 = vmatpush1.msra.mxu0 0.0
        %760 = vmatprep.subr.mxu0 0.0
        %761 = vmatpush1.msra.mxu0 0.0
        %762 = vmatprep.subr.mxu0 0.0
        %763 = vmatpush1.msra.mxu0 0.0
        %764 = vmatprep.subr.mxu0 0.0
        %765 = vmatpush1.msra.mxu0 0.0
        %766 = vmatprep.subr.mxu0 0.0
        %767 = vmatpush1.msra.mxu0 0.0
        %768 = vmatprep.subr.mxu0 0.0
        %769 = vmatpush1.msra.mxu0 0.0
        %770 = vmatprep.subr.mxu0 0.0
        %771 = vmatpush1.msra.mxu0 0.0
        %772 = vmatprep.subr.mxu0 0.0
        %773 = vmatpush1.msra.mxu0 0.0
        %774 = vmatprep.subr.mxu0 0.0
        %775 = vmatpush1.msra.mxu0 0.0
        %776 = vmatprep.subr.mxu0 0.0
        %777 = vmatpush1.msra.mxu0 0.0
        %778 = vmatprep.subr.mxu0 0.0
        %779 = vmatpush1.msra.mxu0 0.0
        %780 = vmatprep.subr.mxu0 0.0
        %781 = vmatpush1.msra.mxu0 0.0
        %782 = vmatprep.subr.mxu0 0.0
        %783 = vmatpush1.msra.mxu0 0.0
        %784 = vmatprep.subr.mxu0 0.0
        %785 = vmatpush1.msra.mxu0 0.0
        %786 = vmatprep.subr.mxu0 0.0
        %787 = vmatpush1.msra.mxu0 0.0
        %788 = vmatprep.subr.mxu0 0.0
        %789 = vmatpush1.msra.mxu0 0.0
        %790 = vmatprep.subr.mxu0 0.0
        %791 = vmatpush1.msra.mxu0 0.0
        %792 = vmatprep.subr.mxu0 0.0
        %793 = vmatpush1.msra.mxu0 0.0
        %794 = vmatprep.subr.mxu0 0.0
        %795 = vmatpush1.msra.mxu0 0.0
        %796 = vmatprep.subr.mxu0 0.0
        %797 = vmatpush1.msra.mxu0 0.0
        %798 = vmatprep.subr.mxu0 0.0
        %799 = vmatpush1.msra.mxu0 0.0
        %800 = vmatprep.subr.mxu0 0.0
        %801 = vmatpush1.msra.mxu0 0.0
        %802 = vmatprep.mubr.f32.mxu0 0.0
        %803 = vmatmul.mubr.f32.gmra.mrb[0].mxu0 %v733
        %v804 = vpop.f32.mrb[0].mxu0
        %v805 = vadd.f32 0.0, %v804
        %v806 = vpop.f32.mrb[0].mxu0
        %807 = vdwg.mxu0
        %809 = vset.pattern.permute.xlu0 0
        %810 = vperm.xlu0 %809, %v805
        %v811 = vpop.permute.xlu0 %810
        %v813 = vsub.f32 %v717, %v811
        %v814 = vsub.f32 %v719, %v811
        %v815 = vmul.f32 %v813, %v813
        %v816 = vmul.f32 %v814, %v814
        %v817 = vsel %vm637, %v815, 0.0
        %v818 = vsel %vm637, %v816, 0.0
        %v819 = vadd.f32 %v817, %v818
        %820 = vadd.xlane.f32.xlu0 %v819
        %v821 = vpop.xlane.xlu0 %820
        %v823 = vsel %vm637, %v821, 0
        %825 = vmatprep.subr.mxu0 0.0
        %826 = vmatpush1.msra.mxu0 %v823
        %827 = vmatprep.subr.mxu0 0.0
        %828 = vmatpush1.msra.mxu0 0.0
        %829 = vmatprep.subr.mxu0 0.0
        %830 = vmatpush1.msra.mxu0 0.0
        %831 = vmatprep.subr.mxu0 0.0
        %832 = vmatpush1.msra.mxu0 0.0
        %833 = vmatprep.subr.mxu0 0.0
        %834 = vmatpush1.msra.mxu0 0.0
        %835 = vmatprep.subr.mxu0 0.0
        %836 = vmatpush1.msra.mxu0 0.0
        %837 = vmatprep.subr.mxu0 0.0
        %838 = vmatpush1.msra.mxu0 0.0
        %839 = vmatprep.subr.mxu0 0.0
        %840 = vmatpush1.msra.mxu0 0.0
        %841 = vmatprep.subr.mxu0 0.0
        %842 = vmatpush1.msra.mxu0 0.0
        %843 = vmatprep.subr.mxu0 0.0
        %844 = vmatpush1.msra.mxu0 0.0
        %845 = vmatprep.subr.mxu0 0.0
        %846 = vmatpush1.msra.mxu0 0.0
        %847 = vmatprep.subr.mxu0 0.0
        %848 = vmatpush1.msra.mxu0 0.0
        %849 = vmatprep.subr.mxu0 0.0
        %850 = vmatpush1.msra.mxu0 0.0
        %851 = vmatprep.subr.mxu0 0.0
        %852 = vmatpush1.msra.mxu0 0.0
        %853 = vmatprep.subr.mxu0 0.0
        %854 = vmatpush1.msra.mxu0 0.0
        %855 = vmatprep.subr.mxu0 0.0
        %856 = vmatpush1.msra.mxu0 0.0
        %857 = vmatprep.subr.mxu0 0.0
        %858 = vmatpush1.msra.mxu0 0.0
        %859 = vmatprep.subr.mxu0 0.0
        %860 = vmatpush1.msra.mxu0 0.0
        %861 = vmatprep.subr.mxu0 0.0
        %862 = vmatpush1.msra.mxu0 0.0
        %863 = vmatprep.subr.mxu0 0.0
        %864 = vmatpush1.msra.mxu0 0.0
        %865 = vmatprep.subr.mxu0 0.0
        %866 = vmatpush1.msra.mxu0 0.0
        %867 = vmatprep.subr.mxu0 0.0
        %868 = vmatpush1.msra.mxu0 0.0
        %869 = vmatprep.subr.mxu0 0.0
        %870 = vmatpush1.msra.mxu0 0.0
        %871 = vmatprep.subr.mxu0 0.0
        %872 = vmatpush1.msra.mxu0 0.0
        %873 = vmatprep.subr.mxu0 0.0
        %874 = vmatpush1.msra.mxu0 0.0
        %875 = vmatprep.subr.mxu0 0.0
        %876 = vmatpush1.msra.mxu0 0.0
        %877 = vmatprep.subr.mxu0 0.0
        %878 = vmatpush1.msra.mxu0 0.0
        %879 = vmatprep.subr.mxu0 0.0
        %880 = vmatpush1.msra.mxu0 0.0
        %881 = vmatprep.subr.mxu0 0.0
        %882 = vmatpush1.msra.mxu0 0.0
        %883 = vmatprep.subr.mxu0 0.0
        %884 = vmatpush1.msra.mxu0 0.0
        %885 = vmatprep.subr.mxu0 0.0
        %886 = vmatpush1.msra.mxu0 0.0
        %887 = vmatprep.subr.mxu0 0.0
        %888 = vmatpush1.msra.mxu0 0.0
        %889 = vmatprep.mubr.f32.mxu0 0.0
        %890 = vmatmul.mubr.f32.gmra.mrb[0].mxu0 %v733
        %v891 = vpop.f32.mrb[0].mxu0
        %v892 = vadd.f32 1e-05, %v891
        %v893 = vpop.f32.mrb[0].mxu0
        %894 = vdwg.mxu0
        %v895 = vrsqrt.pop %v892
        %v896 = vmul.f32 %v895, %v723
        %898 = vset.pattern.permute.xlu0 0
        %899 = vperm.xlu0 %898, %v896
        %v900 = vpop.permute.xlu0 %899
        %v902 = vmul.f32 %v813, %v900
        %v903 = vmul.f32 %v814, %v900
        %905 = vset.pattern.permute.xlu0 0
        %906 = vperm.xlu0 %905, %v724
        %v907 = vpop.permute.xlu0 %906
        %v909 = vadd.f32 %v902, %v907
        %v910 = vadd.f32 %v903, %v907
        %vm911 = vcmp.gt.f32.partialorder %v909, 0.0
        %vm912 = vcmp.gt.f32.partialorder %v910, 0.0
        %v913 = vmul.f32 %v909, 0.2
        %v914 = vmul.f32 %v910, 0.2
        %v915 = vsel %vm911, %v909, %v913
        %v916 = vsel %vm912, %v910, %v914
        %917 = vrot.lane.b32.xlu0 %v915, 17
        %v918 = vpop.permute.xlu0 %917
        %919 = vrot.lane.b32.xlu0 %v916, 17
        %v920 = vpop.permute.xlu0 %919
        %v921 = vsel %vm428, %v918, %v920
        %v922 = vsel %vm428, %v920, %v918
        %v923 = vpack.c.bf16 %v922, %v922
        %v924 = vpack.c.bf16 %v921, %v921
        %v925 = vmul.bf16 %v923, %v444
        %v926 = vmul.bf16 %v924, %v451
        %927 = vrot.lane.b32.xlu0 %v915, 16
        %v928 = vpop.permute.xlu0 %927
        %929 = vrot.lane.b32.xlu0 %v916, 16
        %v930 = vpop.permute.xlu0 %929
        %v931 = vsel %vm458, %v928, %v930
        %v932 = vsel %vm458, %v930, %v928
        %v933 = vpack.c.bf16 %v932, %v932
        %v934 = vpack.c.bf16 %v931, %v931
        %v935 = vmul.bf16 %v933, %v469
        %v936 = vmul.bf16 %v934, %v476
        %937 = vrot.lane.b32.xlu0 %v915, 15
        %v938 = vpop.permute.xlu0 %937
        %939 = vrot.lane.b32.xlu0 %v916, 15
        %v940 = vpop.permute.xlu0 %939
        %v941 = vsel %vm483, %v938, %v940
        %v942 = vsel %vm483, %v940, %v938
        %v943 = vpack.c.bf16 %v942, %v942
        %v944 = vpack.c.bf16 %v941, %v941
        %v945 = vmul.bf16 %v943, %v491
        %v946 = vmul.bf16 %v944, %v495
        %947 = vrot.lane.b32.xlu0 %v915, 1
        %v948 = vpop.permute.xlu0 %947
        %949 = vrot.lane.b32.xlu0 %v916, 1
        %v950 = vpop.permute.xlu0 %949
        %v951 = vsel %vm502, %v948, %v950
        %v952 = vsel %vm502, %v950, %v948
        %v953 = vpack.c.bf16 %v952, %v952
        %v954 = vpack.c.bf16 %v951, %v951
        %v955 = vmul.bf16 %v953, %v510
        %v956 = vmul.bf16 %v954, %v514
        %v957 = vpack.c.bf16 %v915, %v915
        %v958 = vpack.c.bf16 %v916, %v916
        %959 = vrot.lane.b32.xlu0 %v915, 127
        %v960 = vpop.permute.xlu0 %959
        %961 = vrot.lane.b32.xlu0 %v916, 127
        %v962 = vpop.permute.xlu0 %961
        %v963 = vsel %vm523, %v960, %v962
        %v964 = vsel %vm523, %v962, %v960
        %v965 = vpack.c.bf16 %v963, %v963
        %v966 = vpack.c.bf16 %v964, %v964
        %v967 = vmul.bf16 %v965, %v531
        %v968 = vmul.bf16 %v966, %v535
        %969 = vrot.lane.b32.xlu0 %v915, 113
        %v970 = vpop.permute.xlu0 %969
        %971 = vrot.lane.b32.xlu0 %v916, 113
        %v972 = vpop.permute.xlu0 %971
        %v973 = vsel %vm542, %v970, %v972
        %v974 = vsel %vm542, %v972, %v970
        %v975 = vpack.c.bf16 %v973, %v973
        %v976 = vpack.c.bf16 %v974, %v974
        %v977 = vmul.bf16 %v975, %v550
        %v978 = vmul.bf16 %v976, %v554
        %979 = vrot.lane.b32.xlu0 %v915, 112
        %v980 = vpop.permute.xlu0 %979
        %981 = vrot.lane.b32.xlu0 %v916, 112
        %v982 = vpop.permute.xlu0 %981
        %v983 = vsel %vm561, %v980, %v982
        %v984 = vsel %vm561, %v982, %v980
        %v985 = vpack.c.bf16 %v983, %v983
        %v986 = vpack.c.bf16 %v984, %v984
        %v987 = vmul.bf16 %v985, %v569
        %v988 = vmul.bf16 %v986, %v573
        %989 = vrot.lane.b32.xlu0 %v915, 111
        %v990 = vpop.permute.xlu0 %989
        %991 = vrot.lane.b32.xlu0 %v916, 111
        %v992 = vpop.permute.xlu0 %991
        %v993 = vsel %vm580, %v990, %v992
        %v994 = vsel %vm580, %v992, %v990
        %v995 = vpack.c.bf16 %v993, %v993
        %v996 = vpack.c.bf16 %v994, %v994
        %v997 = vmul.bf16 %v995, %v596
        %v998 = vmul.bf16 %v996, %v603
        %v1001 = vrot.slane %v935, 6
        %v1002 = vrot.slane %v936, 6
        %v1005 = vrot.slane %v945, 4
        %v1006 = vrot.slane %v946, 4
        %v1009 = vrot.slane %v955, 2
        %v1010 = vrot.slane %v956, 2
        %v1013 = vrot.slane %v967, 6
        %v1014 = vrot.slane %v968, 6
        %v1017 = vrot.slane %v977, 4
        %v1018 = vrot.slane %v978, 4
        %v1021 = vrot.slane %v987, 2
        %v1022 = vrot.slane %v988, 2
        %v1025 = vsel %vm630, %v925, %v1001
        %v1028 = vsel %vm630, %v926, %v1002
        %v1030 = vsel %vm637, %v1025, %v1005
        %v1032 = vsel %vm637, %v1028, %v1006
        %v1034 = vsel %vm642, %v1030, %v1009
        %v1037 = vsel %vm642, %v1032, %v1010
        %v1041 = vsel %vm630, %v957, %v1013
        %v1044 = vsel %vm630, %v958, %v1014
        %v1046 = vsel %vm637, %v1041, %v1017
        %v1048 = vsel %vm637, %v1044, %v1018
        %v1050 = vsel %vm642, %v1046, %v1021
        %v1053 = vsel %vm642, %v1048, %v1022
        %v1055 = vld [vmem:[%s7] sm:$0xf]
        %v1057 = vsel %vm672, %v1055, 0
        %v1060 = vsel %vm630, %v997, 0
        %v1063 = vsel %vm630, %v998, 0
        %1065 = vmatprep.subr.bf16.mxu0 %v1037
        %1066 = vmatpush1.bf16.msra.mxu0 %v1034
        %1067 = vmatprep.subr.bf16.mxu0 %v1053
        %1068 = vmatpush1.bf16.msra.mxu0 %v1050
        %1069 = vmatprep.subr.bf16.mxu0 %v1063
        %1070 = vmatpush1.bf16.msra.mxu0 %v1060
        %1071 = vmatprep.subr.bf16.mxu0 0
        %1072 = vmatpush1.bf16.msra.mxu0 0
        %1073 = vmatprep.subr.bf16.mxu0 0
        %1074 = vmatpush1.bf16.msra.mxu0 0
        %1075 = vmatprep.subr.bf16.mxu0 0
        %1076 = vmatpush1.bf16.msra.mxu0 0
        %1077 = vmatprep.subr.bf16.mxu0 0
        %1078 = vmatpush1.bf16.msra.mxu0 0
        %1079 = vmatprep.subr.bf16.mxu0 0
        %1080 = vmatpush1.bf16.msra.mxu0 0
        %1081 = vmatprep.subr.bf16.mxu0 0
        %1082 = vmatpush1.bf16.msra.mxu0 0
        %1083 = vmatprep.subr.bf16.mxu0 0
        %1084 = vmatpush1.bf16.msra.mxu0 0
        %1085 = vmatprep.subr.bf16.mxu0 0
        %1086 = vmatpush1.bf16.msra.mxu0 0
        %1087 = vmatprep.subr.bf16.mxu0 0
        %1088 = vmatpush1.bf16.msra.mxu0 0
        %1089 = vmatprep.subr.bf16.mxu0 0
        %1090 = vmatpush1.bf16.msra.mxu0 0
        %1091 = vmatprep.subr.bf16.mxu0 0
        %1092 = vmatpush1.bf16.msra.mxu0 0
        %1093 = vmatprep.subr.bf16.mxu0 0
        %1094 = vmatpush1.bf16.msra.mxu0 0
        %1095 = vmatprep.subr.bf16.mxu0 0
        %1096 = vmatpush1.bf16.msra.mxu0 0
        %1097 = vmatprep.mubr.bf16.mxu0 0
        %1098 = vmatmul.mubr.bf16.gmra.mrb[0].mxu0 %v1057
        %v1099 = vpop.f32.mrb[0].mxu0
        %v1100 = vadd.f32 0.0, %v1099
        %v1101 = vpop.f32.mrb[0].mxu0
        %v1102 = vadd.f32 0.0, %v1101
        %v1103 = vpop.f32.mrb[0].mxu0
        %v1104 = vpop.f32.mrb[0].mxu0
        %1105 = vdwg.mxu0
        %v1106 = vld [vmem:[%s8] sm:$0xff]
        %v1107 = vld [vmem:[%s9] sm:$0xff]
        %v1108 = vld [vmem:[%s10] sm:$0xff]
        %v1109 = vadd.f32 %v1100, %v1102
        %1110 = vadd.xlane.f32.xlu0 %v1109
        %v1111 = vpop.xlane.xlu0 %1110
        %vm1112 = vcmask 64512
        %v1114 = vsel %vm1112, %v1108, 0
        %1116 = vmatprep.subr.mxu0 0.0
        %1117 = vmatpush1.msra.mxu0 %v1111
        %1118 = vmatprep.subr.mxu0 0.0
        %1119 = vmatpush1.msra.mxu0 0.0
        %1120 = vmatprep.subr.mxu0 0.0
        %1121 = vmatpush1.msra.mxu0 0.0
        %1122 = vmatprep.subr.mxu0 0.0
        %1123 = vmatpush1.msra.mxu0 0.0
        %1124 = vmatprep.subr.mxu0 0.0
        %1125 = vmatpush1.msra.mxu0 0.0
        %1126 = vmatprep.subr.mxu0 0.0
        %1127 = vmatpush1.msra.mxu0 0.0
        %1128 = vmatprep.subr.mxu0 0.0
        %1129 = vmatpush1.msra.mxu0 0.0
        %1130 = vmatprep.subr.mxu0 0.0
        %1131 = vmatpush1.msra.mxu0 0.0
        %1132 = vmatprep.subr.mxu0 0.0
        %1133 = vmatpush1.msra.mxu0 0.0
        %1134 = vmatprep.subr.mxu0 0.0
        %1135 = vmatpush1.msra.mxu0 0.0
        %1136 = vmatprep.subr.mxu0 0.0
        %1137 = vmatpush1.msra.mxu0 0.0
        %1138 = vmatprep.subr.mxu0 0.0
        %1139 = vmatpush1.msra.mxu0 0.0
        %1140 = vmatprep.subr.mxu0 0.0
        %1141 = vmatpush1.msra.mxu0 0.0
        %1142 = vmatprep.subr.mxu0 0.0
        %1143 = vmatpush1.msra.mxu0 0.0
        %1144 = vmatprep.subr.mxu0 0.0
        %1145 = vmatpush1.msra.mxu0 0.0
        %1146 = vmatprep.subr.mxu0 0.0
        %1147 = vmatpush1.msra.mxu0 0.0
        %1148 = vmatprep.subr.mxu0 0.0
        %1149 = vmatpush1.msra.mxu0 0.0
        %1150 = vmatprep.subr.mxu0 0.0
        %1151 = vmatpush1.msra.mxu0 0.0
        %1152 = vmatprep.subr.mxu0 0.0
        %1153 = vmatpush1.msra.mxu0 0.0
        %1154 = vmatprep.subr.mxu0 0.0
        %1155 = vmatpush1.msra.mxu0 0.0
        %1156 = vmatprep.subr.mxu0 0.0
        %1157 = vmatpush1.msra.mxu0 0.0
        %1158 = vmatprep.subr.mxu0 0.0
        %1159 = vmatpush1.msra.mxu0 0.0
        %1160 = vmatprep.subr.mxu0 0.0
        %1161 = vmatpush1.msra.mxu0 0.0
        %1162 = vmatprep.subr.mxu0 0.0
        %1163 = vmatpush1.msra.mxu0 0.0
        %1164 = vmatprep.subr.mxu0 0.0
        %1165 = vmatpush1.msra.mxu0 0.0
        %1166 = vmatprep.subr.mxu0 0.0
        %1167 = vmatpush1.msra.mxu0 0.0
        %1168 = vmatprep.subr.mxu0 0.0
        %1169 = vmatpush1.msra.mxu0 0.0
        %1170 = vmatprep.subr.mxu0 0.0
        %1171 = vmatpush1.msra.mxu0 0.0
        %1172 = vmatprep.subr.mxu0 0.0
        %1173 = vmatpush1.msra.mxu0 0.0
        %1174 = vmatprep.subr.mxu0 0.0
        %1175 = vmatpush1.msra.mxu0 0.0
        %1176 = vmatprep.subr.mxu0 0.0
        %1177 = vmatpush1.msra.mxu0 0.0
        %1178 = vmatprep.subr.mxu0 0.0
        %1179 = vmatpush1.msra.mxu0 0.0
        %1180 = vmatprep.mubr.f32.mxu0 0.0
        %1181 = vmatmul.mubr.f32.gmra.mrb[0].mxu0 %v1114
        %v1182 = vpop.f32.mrb[0].mxu0
        %v1183 = vadd.f32 0.0, %v1182
        %v1184 = vpop.f32.mrb[0].mxu0
        %1185 = vdwg.mxu0
        %1187 = vset.pattern.permute.xlu0 0
        %1188 = vperm.xlu0 %1187, %v1183
        %v1189 = vpop.permute.xlu0 %1188
        %v1191 = vsub.f32 %v1100, %v1189
        %v1192 = vsub.f32 %v1102, %v1189
        %v1193 = vmul.f32 %v1191, %v1191
        %v1194 = vmul.f32 %v1192, %v1192
        %v1195 = vadd.f32 %v1193, %v1194
        %1196 = vadd.xlane.f32.xlu0 %v1195
        %v1197 = vpop.xlane.xlu0 %1196
        %1198 = vmatprep.subr.mxu0 0.0
        %1199 = vmatpush1.msra.mxu0 %v1197
        %1200 = vmatprep.subr.mxu0 0.0
        %1201 = vmatpush1.msra.mxu0 0.0
        %1202 = vmatprep.subr.mxu0 0.0
        %1203 = vmatpush1.msra.mxu0 0.0
        %1204 = vmatprep.subr.mxu0 0.0
        %1205 = vmatpush1.msra.mxu0 0.0
        %1206 = vmatprep.subr.mxu0 0.0
        %1207 = vmatpush1.msra.mxu0 0.0
        %1208 = vmatprep.subr.mxu0 0.0
        %1209 = vmatpush1.msra.mxu0 0.0
        %1210 = vmatprep.subr.mxu0 0.0
        %1211 = vmatpush1.msra.mxu0 0.0
        %1212 = vmatprep.subr.mxu0 0.0
        %1213 = vmatpush1.msra.mxu0 0.0
        %1214 = vmatprep.subr.mxu0 0.0
        %1215 = vmatpush1.msra.mxu0 0.0
        %1216 = vmatprep.subr.mxu0 0.0
        %1217 = vmatpush1.msra.mxu0 0.0
        %1218 = vmatprep.subr.mxu0 0.0
        %1219 = vmatpush1.msra.mxu0 0.0
        %1220 = vmatprep.subr.mxu0 0.0
        %1221 = vmatpush1.msra.mxu0 0.0
        %1222 = vmatprep.subr.mxu0 0.0
        %1223 = vmatpush1.msra.mxu0 0.0
        %1224 = vmatprep.subr.mxu0 0.0
        %1225 = vmatpush1.msra.mxu0 0.0
        %1226 = vmatprep.subr.mxu0 0.0
        %1227 = vmatpush1.msra.mxu0 0.0
        %1228 = vmatprep.subr.mxu0 0.0
        %1229 = vmatpush1.msra.mxu0 0.0
        %1230 = vmatprep.subr.mxu0 0.0
        %1231 = vmatpush1.msra.mxu0 0.0
        %1232 = vmatprep.subr.mxu0 0.0
        %1233 = vmatpush1.msra.mxu0 0.0
        %1234 = vmatprep.subr.mxu0 0.0
        %1235 = vmatpush1.msra.mxu0 0.0
        %1236 = vmatprep.subr.mxu0 0.0
        %1237 = vmatpush1.msra.mxu0 0.0
        %1238 = vmatprep.subr.mxu0 0.0
        %1239 = vmatpush1.msra.mxu0 0.0
        %1240 = vmatprep.subr.mxu0 0.0
        %1241 = vmatpush1.msra.mxu0 0.0
        %1242 = vmatprep.subr.mxu0 0.0
        %1243 = vmatpush1.msra.mxu0 0.0
        %1244 = vmatprep.subr.mxu0 0.0
        %1245 = vmatpush1.msra.mxu0 0.0
        %1246 = vmatprep.subr.mxu0 0.0
        %1247 = vmatpush1.msra.mxu0 0.0
        %1248 = vmatprep.subr.mxu0 0.0
        %1249 = vmatpush1.msra.mxu0 0.0
        %1250 = vmatprep.subr.mxu0 0.0
        %1251 = vmatpush1.msra.mxu0 0.0
        %1252 = vmatprep.subr.mxu0 0.0
        %1253 = vmatpush1.msra.mxu0 0.0
        %1254 = vmatprep.subr.mxu0 0.0
        %1255 = vmatpush1.msra.mxu0 0.0
        %1256 = vmatprep.subr.mxu0 0.0
        %1257 = vmatpush1.msra.mxu0 0.0
        %1258 = vmatprep.subr.mxu0 0.0
        %1259 = vmatpush1.msra.mxu0 0.0
        %1260 = vmatprep.subr.mxu0 0.0
        %1261 = vmatpush1.msra.mxu0 0.0
        %1262 = vmatprep.mubr.f32.mxu0 0.0
        %1263 = vmatmul.mubr.f32.gmra.mrb[0].mxu0 %v1114
        %v1264 = vpop.f32.mrb[0].mxu0
        %v1265 = vadd.f32 1e-05, %v1264
        %v1266 = vpop.f32.mrb[0].mxu0
        %1267 = vdwg.mxu0
        %v1268 = vrsqrt.pop %v1265
        %v1269 = vmul.f32 %v1268, %v1106
        %1271 = vset.pattern.permute.xlu0 0
        %1272 = vperm.xlu0 %1271, %v1269
        %v1273 = vpop.permute.xlu0 %1272
        %v1275 = vmul.f32 %v1191, %v1273
        %v1276 = vmul.f32 %v1192, %v1273
        %1278 = vset.pattern.permute.xlu0 0
        %1279 = vperm.xlu0 %1278, %v1107
        %v1280 = vpop.permute.xlu0 %1279
        %v1282 = vadd.f32 %v1275, %v1280
        %v1283 = vadd.f32 %v1276, %v1280
        %v1284 = vld [vmem:[%s11] sm:$0xf]
        %v1286 = vcombine.high %v413, %v413
        %v1288 = vpack.c.bf16 %v413, %v413
        %v1289 = vpack.c.bf16 %v1286, %v1286
        %v1290 = vmul.f32 %v1282, 0.1
        %v1291 = vmul.f32 %v1283, 0.1
        %v1293 = vsel %vm731, %v1284, 0
        %v1296 = vsel %vm630, %v1288, 0
        %v1299 = vsel %vm630, %v1289, 0
        %1301 = vmatprep.subr.bf16.mxu0 %v1299
        %1302 = vmatpush1.bf16.msra.mxu0 %v1296
        %1303 = vmatprep.subr.bf16.mxu0 0
        %1304 = vmatpush1.bf16.msra.mxu0 0
        %1305 = vmatprep.subr.bf16.mxu0 0
        %1306 = vmatpush1.bf16.msra.mxu0 0
        %1307 = vmatprep.subr.bf16.mxu0 0
        %1308 = vmatpush1.bf16.msra.mxu0 0
        %1309 = vmatprep.subr.bf16.mxu0 0
        %1310 = vmatpush1.bf16.msra.mxu0 0
        %1311 = vmatprep.subr.bf16.mxu0 0
        %1312 = vmatpush1.bf16.msra.mxu0 0
        %1313 = vmatprep.subr.bf16.mxu0 0
        %1314 = vmatpush1.bf16.msra.mxu0 0
        %1315 = vmatprep.subr.bf16.mxu0 0
        %1316 = vmatpush1.bf16.msra.mxu0 0
        %1317 = vmatprep.subr.bf16.mxu0 0
        %1318 = vmatpush1.bf16.msra.mxu0 0
        %1319 = vmatprep.subr.bf16.mxu0 0
        %1320 = vmatpush1.bf16.msra.mxu0 0
        %1321 = vmatprep.subr.bf16.mxu0 0
        %1322 = vmatpush1.bf16.msra.mxu0 0
        %1323 = vmatprep.subr.bf16.mxu0 0
        %1324 = vmatpush1.bf16.msra.mxu0 0
        %1325 = vmatprep.subr.bf16.mxu0 0
        %1326 = vmatpush1.bf16.msra.mxu0 0
        %1327 = vmatprep.subr.bf16.mxu0 0
        %1328 = vmatpush1.bf16.msra.mxu0 0
        %1329 = vmatprep.subr.bf16.mxu0 0
        %1330 = vmatpush1.bf16.msra.mxu0 0
        %1331 = vmatprep.subr.bf16.mxu0 0
        %1332 = vmatpush1.bf16.msra.mxu0 0
        %1333 = vmatprep.mubr.bf16.mxu0 0
        %1334 = vmatmul.mubr.bf16.gmra.mrb[0].mxu0 %v1293
        %v1335 = vpop.f32.mrb[0].mxu0
        %v1336 = vadd.f32 %v1290, %v1335
        %v1337 = vpop.f32.mrb[0].mxu0
        %v1338 = vadd.f32 %v1291, %v1337
        %v1339 = vpop.f32.mrb[0].mxu0
        %v1340 = vpop.f32.mrb[0].mxu0
        %1341 = vdwg.mxu0
        %1342 = vst [vmem:[%s406] sm:$0xff] %v1336
        %1343 = vst [vmem:[%s406 + $0x8] sm:$0xff] %v1338
        %s1344 = sand.u32 %s291, 1
        %s1345 = scalar_lea.sflag [#allocation3], %s1344
        %s1346 = sand.u32 %s291, 1
        %s1347 = smul.addr %s1346, 16
        %s1348 = scalar_lea.vmem [#allocation2], %s1347
        // Predicated region
        $region69: #{tpu_custom_call.1} parent=67 // pred_check
          %p1349 = pneg %p301
        $region70: #{tpu_custom_call.1} parent=67 // pred_check_branch
          %1351 = sbr.rel (%p1349) target = $region72
        $region71: #{tpu_custom_call.1} parent=67 // pred_region
          %s1353 = ssub.s32 256, 256
          %1354 = vsyncadd %s1345, %s1353
          %s1355 = smul.addr %s26, 2
          %s1356 = smul.addr %s1355, 128
          %s1357 = scalar_lea.hbm %s12, %s1356
          %s1359 = sshll.u32 %s1348, 4
          %s1360 = int_to_ptr.vmem [resolvable:$true] %s1359
          %1362 = dma.vmem_to_hbm [thread:$0]  %s1360, 256, %s1357, %s1345
        $region72: #{tpu_custom_call.1} parent=67 // pred_fallthru
          _
      $region68: #{tpu_custom_call.1} parent=5 // pred_fallthru
        _
      %p1363 = scmp.le.s32.totalorder 2, %s21
      // Predicated region
      $region73: #{tpu_custom_call.1} parent=5 // pred_check
        %p1364 = pneg %p1363
      $region74: #{tpu_custom_call.1} parent=5 // pred_check_branch
        %1366 = sbr.rel (%p1364) target = $region76
      $region75: #{tpu_custom_call.1} parent=5 // pred_region
        %s1367 = ssub.s32 %s21, 2
        // Predicated region
        $region77: #{tpu_custom_call.1} parent=75 // pred_check
          %p1368 = pneg %p307
        $region78: #{tpu_custom_call.1} parent=75 // pred_check_branch
          %1370 = sbr.rel (%p1368) target = $region80
        $region79: #{tpu_custom_call.1} parent=75 // pred_region
          %s1371 = sand.u32 %s292, 1
          %s1372 = scalar_lea.sflag [#allocation3], %s1371
          %s1373 = sand.u32 %s292, 1
          %s1374 = smul.addr %s1373, 16
          %s1375 = scalar_lea.vmem [#allocation2], %s1374
          %1376 = dma.done %s1372, 256
        $region80: #{tpu_custom_call.1} parent=75 // pred_fallthru
          _
      $region76: #{tpu_custom_call.1} parent=5 // pred_fallthru
        _
    $region6: #{tpu_custom_call.1} parent=1 // loop_footer
      %s25 = sadd.s32 1, %s21
    $region7: #{tpu_custom_call.1} parent=1 // loop_footer_branch
      %20 = sbr.rel target = $region3
    $region8: #{tpu_custom_call.1} parent=1 // loop_exit
      _
    %1377 = vsyncpa [#allocation3], 1
    %s1378 = scalar_lea.sflag [#allocation3], 1
    %1379 = vsyncpa %s1378, 1

</llo_original>
